<compile_context>
chip_gen: v5e
topology: v5e:2x2
jax: 0.10.0
libtpu: 0.0.40
codegen_flags: <defaults>
</compile_context>

<pallas_src>
import functools

import jax
import jax.numpy as jnp
from jax.experimental import pallas as pl
from jax.experimental.pallas import tpu as pltpu


def _round_up(x, m):
    return ((x + m - 1) // m) * m


def momu_kernel(b_ref, temp_ref, g_ref, t_ref, lg_ref, lt_ref, loss_ref,
                *, mxu_dtype):
    """Single invocation: normalize, 2x MXU matmul, 2x cross-entropy."""
    b_real = b_ref[0]                               # int32 scalar (SMEM)
    inv_temp = 1.0 / temp_ref[0]                    # f32 scalar (SMEM)

    g = g_ref[...].astype(jnp.float32)              # [Bp, Dp]
    t = t_ref[...].astype(jnp.float32)              # [Bp, Dp]

    # F.normalize(dim=-1, eps=1e-12): x / max(||x||, eps). Use rsqrt on the
    # EUP and clamp the squared norm at eps^2 (equivalent up to ~1 ulp).
    eps2 = jnp.float32(1e-24)
    gn_s = g * (inv_temp * jax.lax.rsqrt(jnp.maximum(
        jnp.sum(g * g, axis=-1, keepdims=True), eps2)))     # temperature folded in
    tn = t * jax.lax.rsqrt(jnp.maximum(
        jnp.sum(t * t, axis=-1, keepdims=True), eps2))

    gn_mxu = gn_s.astype(mxu_dtype)
    tn_mxu = tn.astype(mxu_dtype)

    # Both logit matrices via the MXU (no XLU transpose of the [Bp,Bp] tile),
    # f32 accumulation.
    logits_g = jnp.dot(gn_mxu, tn_mxu.T, preferred_element_type=jnp.float32)
    logits_t = jnp.dot(tn_mxu, gn_mxu.T, preferred_element_type=jnp.float32)

    lg_ref[...] = logits_g
    lt_ref[...] = logits_t

    bp = logits_g.shape[0]
    col_ids = jax.lax.broadcasted_iota(jnp.int32, (bp, bp), 1)
    row_ids = jax.lax.broadcasted_iota(jnp.int32, (bp, 1), 0)
    col_valid = col_ids < b_real                    # mask padded logit columns
    row_valid = row_ids < b_real                    # mask padded batch rows

    # Labels are the diagonal in both directions and diag(logits_g) ==
    # diag(logits_t): compute once as a [Bp, Dp] row-wise dot (O(B*D)).
    diag = jnp.sum(gn_s * tn, axis=-1, keepdims=True)       # [Bp, 1]

    neg_big = jnp.float32(-1e30)

    def ce_sum(logits):
        lm = jnp.where(col_valid, logits, neg_big)
        m = jnp.max(lm, axis=-1, keepdims=True)
        lse = m + jnp.log(jnp.sum(jnp.exp(lm - m), axis=-1, keepdims=True))
        return jnp.sum(jnp.where(row_valid, lse - diag, 0.0))

    denom = b_real.astype(jnp.float32)
    loss = 0.5 * (ce_sum(logits_g) + ce_sum(logits_t)) / denom
    loss_ref[...] = jnp.full((1, 1), loss, dtype=jnp.float32)


def momu_forward(features_graph, features_text, temperature,
                 mxu_dtype=jnp.float32):
    """Returns (logits_per_graph [B,B], logits_per_text [B,B], loss scalar)."""
    B, D = features_graph.shape
    assert features_text.shape == (B, D)

    # Pad to hardware tiles: lane-dense feature dim and lane-dense [Bp,Bp]
    # logits outputs (unmasked vld/vst), sublane-aligned rows.
    Bp = _round_up(B, 128)
    Dp = _round_up(D, 128)
    g_pad = jnp.pad(features_graph, ((0, Bp - B), (0, Dp - D)))
    t_pad = jnp.pad(features_text, ((0, Bp - B), (0, Dp - D)))

    b_arr = jnp.array([B], dtype=jnp.int32)
    temp_arr = jnp.array([temperature], dtype=jnp.float32)

    cost = pl.CostEstimate(
        flops=2 * 2 * Bp * Bp * Dp + 8 * Bp * Dp + 8 * Bp * Bp,
        transcendentals=2 * Bp * Bp + 2 * Bp,
        bytes_accessed=(2 * Bp * Dp + 2 * Bp * Bp + 1) * 4 + 8,
    )

    lg, lt, loss = pl.pallas_call(
        functools.partial(momu_kernel, mxu_dtype=mxu_dtype),
        out_shape=(
            jax.ShapeDtypeStruct((Bp, Bp), jnp.float32),   # logits_per_graph
            jax.ShapeDtypeStruct((Bp, Bp), jnp.float32),   # logits_per_text
            jax.ShapeDtypeStruct((1, 1), jnp.float32),     # loss
        ),
        in_specs=[
            pl.BlockSpec(memory_space=pltpu.MemorySpace.SMEM),   # real batch B
            pl.BlockSpec(memory_space=pltpu.MemorySpace.SMEM),   # temperature
            pl.BlockSpec(memory_space=pltpu.MemorySpace.VMEM),
            pl.BlockSpec(memory_space=pltpu.MemorySpace.VMEM),
        ],
        out_specs=(
            pl.BlockSpec(memory_space=pltpu.MemorySpace.VMEM),
            pl.BlockSpec(memory_space=pltpu.MemorySpace.VMEM),
            pl.BlockSpec(memory_space=pltpu.MemorySpace.VMEM),
        ),
        cost_estimate=cost,
    )(b_arr, temp_arr, g_pad, t_pad)

    return lg[:B, :B], lt[:B, :B], loss[0, 0]


def momu_forward_ref(features_graph, features_text, temperature):
    """Pure-JAX reference mirroring the PyTorch forward, for correctness."""
    eps = 1e-12
    g = features_graph / jnp.maximum(
        jnp.linalg.norm(features_graph, axis=-1, keepdims=True), eps)
    t = features_text / jnp.maximum(
        jnp.linalg.norm(features_text, axis=-1, keepdims=True), eps)
    logits_g = (g @ t.T) / temperature
    logits_t = logits_g.T
    B = g.shape[0]
    labels = jnp.arange(B)

    def ce(logits):
        logp = jax.nn.log_softmax(logits, axis=-1)
        return -jnp.mean(logp[jnp.arange(B), labels])

    loss = 0.5 * (ce(logits_g) + ce(logits_t))
    return logits_g, logits_t, loss


if __name__ == "__main__":
    key = jax.random.PRNGKey(0)
    kg, kt = jax.random.split(key)

    # Small shapes consistent with the module: batch=8, projection_dim=32.
    B, D = 8, 32
    features_graph = jax.random.normal(kg, (B, D), dtype=jnp.float32)
    features_text = jax.random.normal(kt, (B, D), dtype=jnp.float32)
    temperature = 0.1  # deterministic init (self.temperature undefined in __init__)

    # f32 MXU operands for the tight-tolerance test; pass mxu_dtype=jnp.bfloat16
    # for large batches on v6e/v7x.
    lg, lt, loss = momu_forward(features_graph, features_text, temperature)
    jax.block_until_ready((lg, lt, loss))

    lg_ref, lt_ref, loss_ref = momu_forward_ref(features_graph, features_text,
                                                temperature)
    assert jnp.allclose(lg, lg_ref, atol=1e-4, rtol=1e-4)
    assert jnp.allclose(lt, lt_ref, atol=1e-4, rtol=1e-4)
    assert jnp.allclose(loss, loss_ref, atol=1e-4, rtol=1e-4)

    print("KERNEL_OK")
</pallas_src>

<mosaic_0001>
module attributes {stable_mosaic.version = 11 : i64} {
  func.func @momu_kernel(%arg0: memref<1xi32, #tpu.memory_space<smem>>, %arg1: memref<1xf32, #tpu.memory_space<smem>>, %arg2: memref<128x128xf32, #tpu.memory_space<vmem>>, %arg3: memref<128x128xf32, #tpu.memory_space<vmem>>, %arg4: memref<128x128xf32, #tpu.memory_space<vmem>>, %arg5: memref<128x128xf32, #tpu.memory_space<vmem>>, %arg6: memref<1x1xf32, #tpu.memory_space<vmem>>) attributes {dimension_semantics = [], scalar_prefetch = 0 : i64, scratch_operands = 0 : i64, tpu.core_type = #tpu.core_type<tc>} {
    %c0 = arith.constant 0 : index
    %0 = memref.load %arg0[%c0] : memref<1xi32, #tpu.memory_space<smem>>
    %c0_0 = arith.constant 0 : index
    %1 = memref.load %arg1[%c0_0] : memref<1xf32, #tpu.memory_space<smem>>
    %cst = arith.constant 1.000000e+00 : f32
    %2 = arith.divf %cst, %1 : f32
    %c0_1 = arith.constant 0 : index
    %c0_2 = arith.constant 0 : index
    %3 = vector.load %arg2[%c0_1, %c0_2] : memref<128x128xf32, #tpu.memory_space<vmem>>, vector<128x128xf32>
    %c0_3 = arith.constant 0 : index
    %c0_4 = arith.constant 0 : index
    %4 = vector.load %arg3[%c0_3, %c0_4] : memref<128x128xf32, #tpu.memory_space<vmem>>, vector<128x128xf32>
    %5 = arith.mulf %3, %3 : vector<128x128xf32>
    %cst_5 = arith.constant dense<0.000000e+00> : vector<128xf32>
    %6 = vector.multi_reduction <add>, %5, %cst_5 [1] : vector<128x128xf32> to vector<128xf32>
    %7 = vector.shape_cast %6 : vector<128xf32> to vector<128x1xf32>
    %cst_6 = arith.constant 1.000000e-24 : f32
    %8 = vector.broadcast %cst_6 : f32 to vector<128x1xf32>
    %9 = arith.maximumf %7, %8 : vector<128x1xf32>
    %10 = math.rsqrt %9 : vector<128x1xf32>
    %11 = vector.broadcast %2 : f32 to vector<128x1xf32>
    %12 = arith.mulf %11, %10 : vector<128x1xf32>
    %13 = vector.broadcast %12 : vector<128x1xf32> to vector<128x128xf32>
    %14 = arith.mulf %3, %13 : vector<128x128xf32>
    %15 = arith.mulf %4, %4 : vector<128x128xf32>
    %cst_7 = arith.constant dense<0.000000e+00> : vector<128xf32>
    %16 = vector.multi_reduction <add>, %15, %cst_7 [1] : vector<128x128xf32> to vector<128xf32>
    %17 = vector.shape_cast %16 : vector<128xf32> to vector<128x1xf32>
    %cst_8 = arith.constant 1.000000e-24 : f32
    %18 = vector.broadcast %cst_8 : f32 to vector<128x1xf32>
    %19 = arith.maximumf %17, %18 : vector<128x1xf32>
    %20 = math.rsqrt %19 : vector<128x1xf32>
    %21 = vector.broadcast %20 : vector<128x1xf32> to vector<128x128xf32>
    %22 = arith.mulf %4, %21 : vector<128x128xf32>
    %23 = tpu.transpose %22, [1, 0] : vector<128x128xf32> -> vector<128x128xf32>
    %cst_9 = arith.constant dense<0.000000e+00> : vector<128x128xf32>
    %24 = tpu.matmul %14, %23, %cst_9 {dimension_numbers = #tpu.dot_dimension_numbers<[1], [0], [0], [1], [0, 0, 1, 1], [], []>} : vector<128x128xf32>, vector<128x128xf32>, vector<128x128xf32> -> vector<128x128xf32>
    %25 = tpu.transpose %14, [1, 0] : vector<128x128xf32> -> vector<128x128xf32>
    %cst_10 = arith.constant dense<0.000000e+00> : vector<128x128xf32>
    %26 = tpu.matmul %22, %25, %cst_10 {dimension_numbers = #tpu.dot_dimension_numbers<[1], [0], [0], [1], [0, 0, 1, 1], [], []>} : vector<128x128xf32>, vector<128x128xf32>, vector<128x128xf32> -> vector<128x128xf32>
    %c0_11 = arith.constant 0 : index
    %c0_12 = arith.constant 0 : index
    %27 = vector.load %arg4[%c0_11, %c0_12] : memref<128x128xf32, #tpu.memory_space<vmem>>, vector<128x128xf32>
    tpu.vector_store %arg4[%c0_11, %c0_12], %24 {strides = array<i32>} : memref<128x128xf32, #tpu.memory_space<vmem>>, vector<128x128xf32>,
    %c0_13 = arith.constant 0 : index
    %c0_14 = arith.constant 0 : index
    %28 = vector.load %arg5[%c0_13, %c0_14] : memref<128x128xf32, #tpu.memory_space<vmem>>, vector<128x128xf32>
    tpu.vector_store %arg5[%c0_13, %c0_14], %26 {strides = array<i32>} : memref<128x128xf32, #tpu.memory_space<vmem>>, vector<128x128xf32>,
    %29 = tpu.iota {dimensions = array<i32: 1>} : vector<128x128xi32>
    %30 = tpu.iota {dimensions = array<i32: 0>} : vector<128x1xi32>
    %31 = vector.broadcast %0 : i32 to vector<128x128xi32>
    %32 = arith.cmpi slt, %29, %31 : vector<128x128xi32>
    %33 = vector.broadcast %0 : i32 to vector<128x1xi32>
    %34 = arith.cmpi slt, %30, %33 : vector<128x1xi32>
    %35 = arith.mulf %14, %22 : vector<128x128xf32>
    %cst_15 = arith.constant dense<0.000000e+00> : vector<128xf32>
    %36 = vector.multi_reduction <add>, %35, %cst_15 [1] : vector<128x128xf32> to vector<128xf32>
    %37 = vector.shape_cast %36 : vector<128xf32> to vector<128x1xf32>
    %38 = arith.sitofp %0 : i32 to f32
    %cst_16 = arith.constant -1.000000e+30 : f32
    %39 = vector.broadcast %cst_16 : f32 to vector<128x128xf32>
    %40 = arith.select %32, %24, %39 : vector<128x128xi1>, vector<128x128xf32>
    %cst_17 = arith.constant dense<0xFF800000> : vector<128xf32>
    %41 = vector.multi_reduction <maximumf>, %40, %cst_17 [1] : vector<128x128xf32> to vector<128xf32>
    %42 = vector.shape_cast %41 : vector<128xf32> to vector<128x1xf32>
    %43 = vector.broadcast %42 : vector<128x1xf32> to vector<128x128xf32>
    %44 = arith.subf %40, %43 : vector<128x128xf32>
    %45 = math.exp %44 : vector<128x128xf32>
    %cst_18 = arith.constant dense<0.000000e+00> : vector<128xf32>
    %46 = vector.multi_reduction <add>, %45, %cst_18 [1] : vector<128x128xf32> to vector<128xf32>
    %47 = vector.shape_cast %46 : vector<128xf32> to vector<128x1xf32>
    %48 = math.log %47 : vector<128x1xf32>
    %49 = arith.addf %42, %48 : vector<128x1xf32>
    %50 = arith.subf %49, %37 : vector<128x1xf32>
    %cst_19 = arith.constant 0.000000e+00 : f32
    %51 = vector.broadcast %cst_19 : f32 to vector<128x1xf32>
    %52 = arith.select %34, %50, %51 : vector<128x1xi1>, vector<128x1xf32>
    %53 = vector.shape_cast %52 : vector<128x1xf32> to vector<1x128x1xf32>
    %cst_20 = arith.constant dense<0.000000e+00> : vector<1xf32>
    %54 = vector.multi_reduction <add>, %53, %cst_20 [1, 2] : vector<1x128x1xf32> to vector<1xf32>
    %55 = vector.shape_cast %54 : vector<1xf32> to vector<1x1x1xf32>
    %56 = vector.extract %55[0, 0, 0] : f32 from vector<1x1x1xf32>
    %cst_21 = arith.constant -1.000000e+30 : f32
    %57 = vector.broadcast %cst_21 : f32 to vector<128x128xf32>
    %58 = arith.select %32, %26, %57 : vector<128x128xi1>, vector<128x128xf32>
    %cst_22 = arith.constant dense<0xFF800000> : vector<128xf32>
    %59 = vector.multi_reduction <maximumf>, %58, %cst_22 [1] : vector<128x128xf32> to vector<128xf32>
    %60 = vector.shape_cast %59 : vector<128xf32> to vector<128x1xf32>
    %61 = vector.broadcast %60 : vector<128x1xf32> to vector<128x128xf32>
    %62 = arith.subf %58, %61 : vector<128x128xf32>
    %63 = math.exp %62 : vector<128x128xf32>
    %cst_23 = arith.constant dense<0.000000e+00> : vector<128xf32>
    %64 = vector.multi_reduction <add>, %63, %cst_23 [1] : vector<128x128xf32> to vector<128xf32>
    %65 = vector.shape_cast %64 : vector<128xf32> to vector<128x1xf32>
    %66 = math.log %65 : vector<128x1xf32>
    %67 = arith.addf %60, %66 : vector<128x1xf32>
    %68 = arith.subf %67, %37 : vector<128x1xf32>
    %cst_24 = arith.constant 0.000000e+00 : f32
    %69 = vector.broadcast %cst_24 : f32 to vector<128x1xf32>
    %70 = arith.select %34, %68, %69 : vector<128x1xi1>, vector<128x1xf32>
    %71 = vector.shape_cast %70 : vector<128x1xf32> to vector<1x128x1xf32>
    %cst_25 = arith.constant dense<0.000000e+00> : vector<1xf32>
    %72 = vector.multi_reduction <add>, %71, %cst_25 [1, 2] : vector<1x128x1xf32> to vector<1xf32>
    %73 = vector.shape_cast %72 : vector<1xf32> to vector<1x1x1xf32>
    %74 = vector.extract %73[0, 0, 0] : f32 from vector<1x1x1xf32>
    %75 = arith.addf %56, %74 : f32
    %cst_26 = arith.constant 5.000000e-01 : f32
    %76 = arith.mulf %cst_26, %75 : f32
    %77 = arith.divf %76, %38 : f32
    %78 = vector.broadcast %77 : f32 to vector<1x1xf32>
    %c0_27 = arith.constant 0 : index
    %c0_28 = arith.constant 0 : index
    %79 = vector.load %arg6[%c0_27, %c0_28] : memref<1x1xf32, #tpu.memory_space<vmem>>, vector<1x1xf32>
    tpu.vector_store %arg6[%c0_27, %c0_28], %78 {strides = array<i32>} : memref<1x1xf32, #tpu.memory_space<vmem>>, vector<1x1xf32>,
    return
  }
}

</mosaic_0001>

<llo_original>
// kernel: tpu_custom_call.1
$region0: #{tpu_custom_call.1}
  #allocation0 [shape = 'u32[]', space=smem, size = 0x4, offset = 0x4, fixed_abs, tag = 'smem constant byte address 0x4 - core index']
  #allocation1 [shape = 'u32[72,128]{1,0:T(1,128)}', space=vmem, size = 0x9000, scoped, tag = 'internal scratch']
  #allocation2 [shape = 's32[1]{0:T(128)S(6)}', space=smem, size = 0x200, scoped, tag = 'scoped memory for tpu_custom_call.1']
  #allocation3 [shape = 'f32[1]{0:T(128)S(6)}', space=smem, size = 0x200, scoped, tag = 'scoped memory for tpu_custom_call.1']
  %s0 = inlined_call_operand.<no memory space> [shape: s32[1], index: 0, kind: input, shape index: {}]
  %s1 = inlined_call_operand.<no memory space> [shape: f32[1], index: 1, kind: input, shape index: {}]
  %s2 = inlined_call_operand.hbm [shape: f32[128,128], index: 2, kind: input, shape index: {}]
  %s3 = inlined_call_operand.hbm [shape: f32[128,128], index: 3, kind: input, shape index: {}]
  %s4 = inlined_call_operand.hbm [shape: f32[128,128], index: 4, kind: output, shape index: {0}]
  %s5 = inlined_call_operand.hbm [shape: f32[128,128], index: 5, kind: output, shape index: {1}]
  %s6 = inlined_call_operand.hbm [shape: f32[1,1], index: 6, kind: output, shape index: {2}]
  %7 = xla_tuple %s4, %s5, %s6
  %s8 = sld [smem:[#allocation0]]
  $region50: #{tpu_custom_call.1} parent=0
    _
  %s10 = ssub.s32 1, %s8
  %s11 = scalar_select 0, %s10, %s8
  %12 = sst [smem:[#allocation2]] %s0
  %13 = sst [smem:[#allocation3]] %s1
  $region1: #{tpu_custom_call.1} parent=0
    #allocation4 [shape = 'u8[65536]{0}', space=vmem, size = 0x10000, scoped, tag = 'input window, operand 2, single buffered']
    #allocation5 [shape = 's32[1]{0}', space=sflag, size = 0x4, scoped, tag = 'scoped memory for tpu_custom_call.1']
    #allocation6 [shape = 's32[1]{0}', space=sflag, size = 0x4, scoped, tag = 'scoped memory for tpu_custom_call.1']
    #allocation7 [shape = 'u8[65536]{0}', space=vmem, size = 0x10000, scoped, tag = 'input window, operand 3, single buffered']
    #allocation8 [shape = 's32[1]{0}', space=sflag, size = 0x4, scoped, tag = 'scoped memory for tpu_custom_call.1']
    #allocation9 [shape = 'u8[65536]{0}', space=vmem, size = 0x10000, scoped, tag = 'output window, operand 0, single buffered']
    #allocation10 [shape = 'u8[65536]{0}', space=vmem, size = 0x10000, scoped, tag = 'output window, operand 1, single buffered']
    #allocation11 [shape = 's32[1]{0}', space=sflag, size = 0x4, scoped, tag = 'scoped memory for tpu_custom_call.1']
    #allocation12 [shape = 'u8[512]{0}', space=vmem, size = 0x400, scoped, tag = 'output window, operand 2, single buffered']
    %14 = vsyncpa [#allocation5], 0
    %15 = vsyncpa [#allocation8], 0
    %16 = vsyncpa [#allocation6], 0
    %17 = vsyncpa [#allocation11], 0
    // Predicated region
    $region2: #{tpu_custom_call.1} parent=1 // pred_check
      _
    $region3: #{tpu_custom_call.1} parent=1 // pred_check_branch
      %19 = sbr.rel (0) target = $region5
    $region4: #{tpu_custom_call.1} parent=1 // pred_region
      _
    $region5: #{tpu_custom_call.1} parent=1 // pred_fallthru
      _
    // Predicated region
    $region6: #{tpu_custom_call.1} parent=1 // pred_check
      _
    $region7: #{tpu_custom_call.1} parent=1 // pred_check_branch
      %21 = sbr.rel (0) target = $region9
    $region8: #{tpu_custom_call.1} parent=1 // pred_region
      _
    $region9: #{tpu_custom_call.1} parent=1 // pred_fallthru
      _
    // Predicated region
    $region10: #{tpu_custom_call.1} parent=1 // pred_check
      _
    $region11: #{tpu_custom_call.1} parent=1 // pred_check_branch
      %23 = sbr.rel (0) target = $region13
    $region12: #{tpu_custom_call.1} parent=1 // pred_region
      %25 = vsyncadd [#allocation5], 0
      %s26 = sshll.u32 %s2, 4
      %s27 = int_to_ptr.hbm [resolvable:$true] %s26
      %s28 = sshll.u32 [#allocation4], 4
      %s29 = int_to_ptr.vmem [resolvable:$true] %s28
      %34 = dma.hbm_to_vmem [thread:$0]  %s27, 2048, %s29, [#allocation5], 128, 128, 8
    $region13: #{tpu_custom_call.1} parent=1 // pred_fallthru
      _
    // Predicated region
    $region14: #{tpu_custom_call.1} parent=1 // pred_check
      _
    $region15: #{tpu_custom_call.1} parent=1 // pred_check_branch
      %36 = sbr.rel (0) target = $region17
    $region16: #{tpu_custom_call.1} parent=1 // pred_region
      %38 = vsyncadd [#allocation8], 0
      %s39 = sshll.u32 %s3, 4
      %s40 = int_to_ptr.hbm [resolvable:$true] %s39
      %s41 = sshll.u32 [#allocation7], 4
      %s42 = int_to_ptr.vmem [resolvable:$true] %s41
      %47 = dma.hbm_to_vmem [thread:$0]  %s40, 2048, %s42, [#allocation8], 128, 128, 8
    $region17: #{tpu_custom_call.1} parent=1 // pred_fallthru
      _
    // Predicated region
    $region18: #{tpu_custom_call.1} parent=1 // pred_check
      _
    $region19: #{tpu_custom_call.1} parent=1 // pred_check_branch
      %49 = sbr.rel (0) target = $region21
    $region20: #{tpu_custom_call.1} parent=1 // pred_region
      %51 = dma.done [#allocation5], 2048
    $region21: #{tpu_custom_call.1} parent=1 // pred_fallthru
      _
    // Predicated region
    $region22: #{tpu_custom_call.1} parent=1 // pred_check
      _
    $region23: #{tpu_custom_call.1} parent=1 // pred_check_branch
      %53 = sbr.rel (0) target = $region25
    $region24: #{tpu_custom_call.1} parent=1 // pred_region
      %55 = dma.done [#allocation8], 2048
    $region25: #{tpu_custom_call.1} parent=1 // pred_fallthru
      _
    %s56 = sld [smem:[#allocation2]]
    %s57 = sld [smem:[#allocation3]]
    %v58 = vstv %s57
    %v59 = vrcp.pop %v58
    %v60 = vmul.f32 %v58, %v59
    %v61 = vsub.f32 1.0, %v60
    %v62 = vmul.f32 %v59, %v61
    %v63 = vadd.f32 %v59, %v62
    %vm64 = vweird.f32 %v58
    %vm65 = vweird.f32 %v59
    %vm66 = vmor %vm64, %vm65
    %v67 = vsel %vm66, %v59, %v63
    %v68 = vand.u32 2147483647, %v58
    %vm69 = vcmp.eq.f32.partialorder %v68, 8.507059e+37
    %v70 = vand.u32 %v58, 2147483648
    %v71 = vor.u32 1.1754944e-38, %v70
    %v72 = vsel %vm69, %v71, %v67
    %s73 = vtos %v72
    %v74 = vld [vmem:[#allocation4] sm:$0xff]
    %v75 = vld [vmem:[#allocation4 + $0x8] sm:$0xff]
    %v76 = vld [vmem:[#allocation4 + $0x10] sm:$0xff]
    %v77 = vld [vmem:[#allocation4 + $0x18] sm:$0xff]
    %v78 = vld [vmem:[#allocation4 + $0x20] sm:$0xff]
    %v79 = vld [vmem:[#allocation4 + $0x28] sm:$0xff]
    %v80 = vld [vmem:[#allocation4 + $0x30] sm:$0xff]
    %v81 = vld [vmem:[#allocation4 + $0x38] sm:$0xff]
    %v82 = vld [vmem:[#allocation4 + $0x40] sm:$0xff]
    %v83 = vld [vmem:[#allocation4 + $0x48] sm:$0xff]
    %v84 = vld [vmem:[#allocation4 + $0x50] sm:$0xff]
    %v85 = vld [vmem:[#allocation4 + $0x58] sm:$0xff]
    %v86 = vld [vmem:[#allocation4 + $0x60] sm:$0xff]
    %v87 = vld [vmem:[#allocation4 + $0x68] sm:$0xff]
    %v88 = vld [vmem:[#allocation4 + $0x70] sm:$0xff]
    %v89 = vld [vmem:[#allocation4 + $0x78] sm:$0xff]
    %v90 = vld [vmem:[#allocation7] sm:$0xff]
    %v91 = vld [vmem:[#allocation7 + $0x8] sm:$0xff]
    %v92 = vld [vmem:[#allocation7 + $0x10] sm:$0xff]
    %v93 = vld [vmem:[#allocation7 + $0x18] sm:$0xff]
    %v94 = vld [vmem:[#allocation7 + $0x20] sm:$0xff]
    %v95 = vld [vmem:[#allocation7 + $0x28] sm:$0xff]
    %v96 = vld [vmem:[#allocation7 + $0x30] sm:$0xff]
    %v97 = vld [vmem:[#allocation7 + $0x38] sm:$0xff]
    %v98 = vld [vmem:[#allocation7 + $0x40] sm:$0xff]
    %v99 = vld [vmem:[#allocation7 + $0x48] sm:$0xff]
    %v100 = vld [vmem:[#allocation7 + $0x50] sm:$0xff]
    %v101 = vld [vmem:[#allocation7 + $0x58] sm:$0xff]
    %v102 = vld [vmem:[#allocation7 + $0x60] sm:$0xff]
    %v103 = vld [vmem:[#allocation7 + $0x68] sm:$0xff]
    %v104 = vld [vmem:[#allocation7 + $0x70] sm:$0xff]
    %v105 = vld [vmem:[#allocation7 + $0x78] sm:$0xff]
    %v106 = vmul.f32 %v74, %v74
    %v107 = vmul.f32 %v75, %v75
    %v108 = vmul.f32 %v76, %v76
    %v109 = vmul.f32 %v77, %v77
    %v110 = vmul.f32 %v78, %v78
    %v111 = vmul.f32 %v79, %v79
    %v112 = vmul.f32 %v80, %v80
    %v113 = vmul.f32 %v81, %v81
    %v114 = vmul.f32 %v82, %v82
    %v115 = vmul.f32 %v83, %v83
    %v116 = vmul.f32 %v84, %v84
    %v117 = vmul.f32 %v85, %v85
    %v118 = vmul.f32 %v86, %v86
    %v119 = vmul.f32 %v87, %v87
    %v120 = vmul.f32 %v88, %v88
    %v121 = vmul.f32 %v89, %v89
    %122 = vadd.xlane.f32.xlu0 %v106
    %v123 = vpop.xlane.xlu0 %122
    %124 = vadd.xlane.f32.xlu0 %v107
    %v125 = vpop.xlane.xlu0 %124
    %126 = vadd.xlane.f32.xlu0 %v108
    %v127 = vpop.xlane.xlu0 %126
    %128 = vadd.xlane.f32.xlu0 %v109
    %v129 = vpop.xlane.xlu0 %128
    %130 = vadd.xlane.f32.xlu0 %v110
    %v131 = vpop.xlane.xlu0 %130
    %132 = vadd.xlane.f32.xlu0 %v111
    %v133 = vpop.xlane.xlu0 %132
    %134 = vadd.xlane.f32.xlu0 %v112
    %v135 = vpop.xlane.xlu0 %134
    %136 = vadd.xlane.f32.xlu0 %v113
    %v137 = vpop.xlane.xlu0 %136
    %138 = vadd.xlane.f32.xlu0 %v114
    %v139 = vpop.xlane.xlu0 %138
    %140 = vadd.xlane.f32.xlu0 %v115
    %v141 = vpop.xlane.xlu0 %140
    %142 = vadd.xlane.f32.xlu0 %v116
    %v143 = vpop.xlane.xlu0 %142
    %144 = vadd.xlane.f32.xlu0 %v117
    %v145 = vpop.xlane.xlu0 %144
    %146 = vadd.xlane.f32.xlu0 %v118
    %v147 = vpop.xlane.xlu0 %146
    %148 = vadd.xlane.f32.xlu0 %v119
    %v149 = vpop.xlane.xlu0 %148
    %150 = vadd.xlane.f32.xlu0 %v120
    %v151 = vpop.xlane.xlu0 %150
    %152 = vadd.xlane.f32.xlu0 %v121
    %v153 = vpop.xlane.xlu0 %152
    %v154 = vmax.f32 %v123, 1e-24
    %v155 = vmax.f32 %v125, 1e-24
    %v156 = vmax.f32 %v127, 1e-24
    %v157 = vmax.f32 %v129, 1e-24
    %v158 = vmax.f32 %v131, 1e-24
    %v159 = vmax.f32 %v133, 1e-24
    %v160 = vmax.f32 %v135, 1e-24
    %v161 = vmax.f32 %v137, 1e-24
    %v162 = vmax.f32 %v139, 1e-24
    %v163 = vmax.f32 %v141, 1e-24
    %v164 = vmax.f32 %v143, 1e-24
    %v165 = vmax.f32 %v145, 1e-24
    %v166 = vmax.f32 %v147, 1e-24
    %v167 = vmax.f32 %v149, 1e-24
    %v168 = vmax.f32 %v151, 1e-24
    %v169 = vmax.f32 %v153, 1e-24
    %v170 = vrsqrt.pop %v154
    %v171 = vmul.f32 %v170, %v154
    %v172 = vmul.f32 %v171, %v170
    %v173 = vmul.f32 0.5, %v172
    %v174 = vsub.f32 1.5, %v173
    %v175 = vmul.f32 %v170, %v174
    %vm176 = vweird.f32 %v154
    %vm177 = vweird.f32 %v170
    %vm178 = vmor %vm176, %vm177
    %v179 = vsel %vm178, %v170, %v175
    %v180 = vrsqrt.pop %v155
    %v181 = vmul.f32 %v180, %v155
    %v182 = vmul.f32 %v181, %v180
    %v183 = vmul.f32 0.5, %v182
    %v184 = vsub.f32 1.5, %v183
    %v185 = vmul.f32 %v180, %v184
    %vm186 = vweird.f32 %v155
    %vm187 = vweird.f32 %v180
    %vm188 = vmor %vm186, %vm187
    %v189 = vsel %vm188, %v180, %v185
    %v190 = vrsqrt.pop %v156
    %v191 = vmul.f32 %v190, %v156
    %v192 = vmul.f32 %v191, %v190
    %v193 = vmul.f32 0.5, %v192
    %v194 = vsub.f32 1.5, %v193
    %v195 = vmul.f32 %v190, %v194
    %vm196 = vweird.f32 %v156
    %vm197 = vweird.f32 %v190
    %vm198 = vmor %vm196, %vm197
    %v199 = vsel %vm198, %v190, %v195
    %v200 = vrsqrt.pop %v157
    %v201 = vmul.f32 %v200, %v157
    %v202 = vmul.f32 %v201, %v200
    %v203 = vmul.f32 0.5, %v202
    %v204 = vsub.f32 1.5, %v203
    %v205 = vmul.f32 %v200, %v204
    %vm206 = vweird.f32 %v157
    %vm207 = vweird.f32 %v200
    %vm208 = vmor %vm206, %vm207
    %v209 = vsel %vm208, %v200, %v205
    %v210 = vrsqrt.pop %v158
    %v211 = vmul.f32 %v210, %v158
    %v212 = vmul.f32 %v211, %v210
    %v213 = vmul.f32 0.5, %v212
    %v214 = vsub.f32 1.5, %v213
    %v215 = vmul.f32 %v210, %v214
    %vm216 = vweird.f32 %v158
    %vm217 = vweird.f32 %v210
    %vm218 = vmor %vm216, %vm217
    %v219 = vsel %vm218, %v210, %v215
    %v220 = vrsqrt.pop %v159
    %v221 = vmul.f32 %v220, %v159
    %v222 = vmul.f32 %v221, %v220
    %v223 = vmul.f32 0.5, %v222
    %v224 = vsub.f32 1.5, %v223
    %v225 = vmul.f32 %v220, %v224
    %vm226 = vweird.f32 %v159
    %vm227 = vweird.f32 %v220
    %vm228 = vmor %vm226, %vm227
    %v229 = vsel %vm228, %v220, %v225
    %v230 = vrsqrt.pop %v160
    %v231 = vmul.f32 %v230, %v160
    %v232 = vmul.f32 %v231, %v230
    %v233 = vmul.f32 0.5, %v232
    %v234 = vsub.f32 1.5, %v233
    %v235 = vmul.f32 %v230, %v234
    %vm236 = vweird.f32 %v160
    %vm237 = vweird.f32 %v230
    %vm238 = vmor %vm236, %vm237
    %v239 = vsel %vm238, %v230, %v235
    %v240 = vrsqrt.pop %v161
    %v241 = vmul.f32 %v240, %v161
    %v242 = vmul.f32 %v241, %v240
    %v243 = vmul.f32 0.5, %v242
    %v244 = vsub.f32 1.5, %v243
    %v245 = vmul.f32 %v240, %v244
    %vm246 = vweird.f32 %v161
    %vm247 = vweird.f32 %v240
    %vm248 = vmor %vm246, %vm247
    %v249 = vsel %vm248, %v240, %v245
    %v250 = vrsqrt.pop %v162
    %v251 = vmul.f32 %v250, %v162
    %v252 = vmul.f32 %v251, %v250
    %v253 = vmul.f32 0.5, %v252
    %v254 = vsub.f32 1.5, %v253
    %v255 = vmul.f32 %v250, %v254
    %vm256 = vweird.f32 %v162
    %vm257 = vweird.f32 %v250
    %vm258 = vmor %vm256, %vm257
    %v259 = vsel %vm258, %v250, %v255
    %v260 = vrsqrt.pop %v163
    %v261 = vmul.f32 %v260, %v163
    %v262 = vmul.f32 %v261, %v260
    %v263 = vmul.f32 0.5, %v262
    %v264 = vsub.f32 1.5, %v263
    %v265 = vmul.f32 %v260, %v264
    %vm266 = vweird.f32 %v163
    %vm267 = vweird.f32 %v260
    %vm268 = vmor %vm266, %vm267
    %v269 = vsel %vm268, %v260, %v265
    %v270 = vrsqrt.pop %v164
    %v271 = vmul.f32 %v270, %v164
    %v272 = vmul.f32 %v271, %v270
    %v273 = vmul.f32 0.5, %v272
    %v274 = vsub.f32 1.5, %v273
    %v275 = vmul.f32 %v270, %v274
    %vm276 = vweird.f32 %v164
    %vm277 = vweird.f32 %v270
    %vm278 = vmor %vm276, %vm277
    %v279 = vsel %vm278, %v270, %v275
    %v280 = vrsqrt.pop %v165
    %v281 = vmul.f32 %v280, %v165
    %v282 = vmul.f32 %v281, %v280
    %v283 = vmul.f32 0.5, %v282
    %v284 = vsub.f32 1.5, %v283
    %v285 = vmul.f32 %v280, %v284
    %vm286 = vweird.f32 %v165
    %vm287 = vweird.f32 %v280
    %vm288 = vmor %vm286, %vm287
    %v289 = vsel %vm288, %v280, %v285
    %v290 = vrsqrt.pop %v166
    %v291 = vmul.f32 %v290, %v166
    %v292 = vmul.f32 %v291, %v290
    %v293 = vmul.f32 0.5, %v292
    %v294 = vsub.f32 1.5, %v293
    %v295 = vmul.f32 %v290, %v294
    %vm296 = vweird.f32 %v166
    %vm297 = vweird.f32 %v290
    %vm298 = vmor %vm296, %vm297
    %v299 = vsel %vm298, %v290, %v295
    %v300 = vrsqrt.pop %v167
    %v301 = vmul.f32 %v300, %v167
    %v302 = vmul.f32 %v301, %v300
    %v303 = vmul.f32 0.5, %v302
    %v304 = vsub.f32 1.5, %v303
    %v305 = vmul.f32 %v300, %v304
    %vm306 = vweird.f32 %v167
    %vm307 = vweird.f32 %v300
    %vm308 = vmor %vm306, %vm307
    %v309 = vsel %vm308, %v300, %v305
    %v310 = vrsqrt.pop %v168
    %v311 = vmul.f32 %v310, %v168
    %v312 = vmul.f32 %v311, %v310
    %v313 = vmul.f32 0.5, %v312
    %v314 = vsub.f32 1.5, %v313
    %v315 = vmul.f32 %v310, %v314
    %vm316 = vweird.f32 %v168
    %vm317 = vweird.f32 %v310
    %vm318 = vmor %vm316, %vm317
    %v319 = vsel %vm318, %v310, %v315
    %v320 = vrsqrt.pop %v169
    %v321 = vmul.f32 %v320, %v169
    %v322 = vmul.f32 %v321, %v320
    %v323 = vmul.f32 0.5, %v322
    %v324 = vsub.f32 1.5, %v323
    %v325 = vmul.f32 %v320, %v324
    %vm326 = vweird.f32 %v169
    %vm327 = vweird.f32 %v320
    %vm328 = vmor %vm326, %vm327
    %v329 = vsel %vm328, %v320, %v325
    %v330 = vstv %s73
    %v331 = vmul.f32 %v330, %v179
    %v332 = vmul.f32 %v330, %v189
    %v333 = vmul.f32 %v330, %v199
    %v334 = vmul.f32 %v330, %v209
    %v335 = vmul.f32 %v330, %v219
    %v336 = vmul.f32 %v330, %v229
    %v337 = vmul.f32 %v330, %v239
    %v338 = vmul.f32 %v330, %v249
    %v339 = vmul.f32 %v330, %v259
    %v340 = vmul.f32 %v330, %v269
    %v341 = vmul.f32 %v330, %v279
    %v342 = vmul.f32 %v330, %v289
    %v343 = vmul.f32 %v330, %v299
    %v344 = vmul.f32 %v330, %v309
    %v345 = vmul.f32 %v330, %v319
    %v346 = vmul.f32 %v330, %v329
    %v347 = vmul.f32 %v74, %v331
    %v348 = vmul.f32 %v75, %v332
    %v349 = vmul.f32 %v76, %v333
    %v350 = vmul.f32 %v77, %v334
    %v351 = vmul.f32 %v78, %v335
    %v352 = vmul.f32 %v79, %v336
    %v353 = vmul.f32 %v80, %v337
    %v354 = vmul.f32 %v81, %v338
    %v355 = vmul.f32 %v82, %v339
    %v356 = vmul.f32 %v83, %v340
    %v357 = vmul.f32 %v84, %v341
    %v358 = vmul.f32 %v85, %v342
    %v359 = vmul.f32 %v86, %v343
    %v360 = vmul.f32 %v87, %v344
    %v361 = vmul.f32 %v88, %v345
    %v362 = vmul.f32 %v89, %v346
    %v363 = vmul.f32 %v90, %v90
    %v364 = vmul.f32 %v91, %v91
    %v365 = vmul.f32 %v92, %v92
    %v366 = vmul.f32 %v93, %v93
    %v367 = vmul.f32 %v94, %v94
    %v368 = vmul.f32 %v95, %v95
    %v369 = vmul.f32 %v96, %v96
    %v370 = vmul.f32 %v97, %v97
    %v371 = vmul.f32 %v98, %v98
    %v372 = vmul.f32 %v99, %v99
    %v373 = vmul.f32 %v100, %v100
    %v374 = vmul.f32 %v101, %v101
    %v375 = vmul.f32 %v102, %v102
    %v376 = vmul.f32 %v103, %v103
    %v377 = vmul.f32 %v104, %v104
    %v378 = vmul.f32 %v105, %v105
    %379 = vadd.xlane.f32.xlu0 %v363
    %v380 = vpop.xlane.xlu0 %379
    %381 = vadd.xlane.f32.xlu0 %v364
    %v382 = vpop.xlane.xlu0 %381
    %383 = vadd.xlane.f32.xlu0 %v365
    %v384 = vpop.xlane.xlu0 %383
    %385 = vadd.xlane.f32.xlu0 %v366
    %v386 = vpop.xlane.xlu0 %385
    %387 = vadd.xlane.f32.xlu0 %v367
    %v388 = vpop.xlane.xlu0 %387
    %389 = vadd.xlane.f32.xlu0 %v368
    %v390 = vpop.xlane.xlu0 %389
    %391 = vadd.xlane.f32.xlu0 %v369
    %v392 = vpop.xlane.xlu0 %391
    %393 = vadd.xlane.f32.xlu0 %v370
    %v394 = vpop.xlane.xlu0 %393
    %395 = vadd.xlane.f32.xlu0 %v371
    %v396 = vpop.xlane.xlu0 %395
    %397 = vadd.xlane.f32.xlu0 %v372
    %v398 = vpop.xlane.xlu0 %397
    %399 = vadd.xlane.f32.xlu0 %v373
    %v400 = vpop.xlane.xlu0 %399
    %401 = vadd.xlane.f32.xlu0 %v374
    %v402 = vpop.xlane.xlu0 %401
    %403 = vadd.xlane.f32.xlu0 %v375
    %v404 = vpop.xlane.xlu0 %403
    %405 = vadd.xlane.f32.xlu0 %v376
    %v406 = vpop.xlane.xlu0 %405
    %407 = vadd.xlane.f32.xlu0 %v377
    %v408 = vpop.xlane.xlu0 %407
    %409 = vadd.xlane.f32.xlu0 %v378
    %v410 = vpop.xlane.xlu0 %409
    %v411 = vmax.f32 %v380, 1e-24
    %v412 = vmax.f32 %v382, 1e-24
    %v413 = vmax.f32 %v384, 1e-24
    %v414 = vmax.f32 %v386, 1e-24
    %v415 = vmax.f32 %v388, 1e-24
    %v416 = vmax.f32 %v390, 1e-24
    %v417 = vmax.f32 %v392, 1e-24
    %v418 = vmax.f32 %v394, 1e-24
    %v419 = vmax.f32 %v396, 1e-24
    %v420 = vmax.f32 %v398, 1e-24
    %v421 = vmax.f32 %v400, 1e-24
    %v422 = vmax.f32 %v402, 1e-24
    %v423 = vmax.f32 %v404, 1e-24
    %v424 = vmax.f32 %v406, 1e-24
    %v425 = vmax.f32 %v408, 1e-24
    %v426 = vmax.f32 %v410, 1e-24
    %v427 = vrsqrt.pop %v411
    %v428 = vmul.f32 %v427, %v411
    %v429 = vmul.f32 %v428, %v427
    %v430 = vmul.f32 0.5, %v429
    %v431 = vsub.f32 1.5, %v430
    %v432 = vmul.f32 %v427, %v431
    %vm433 = vweird.f32 %v411
    %vm434 = vweird.f32 %v427
    %vm435 = vmor %vm433, %vm434
    %v436 = vsel %vm435, %v427, %v432
    %v437 = vrsqrt.pop %v412
    %v438 = vmul.f32 %v437, %v412
    %v439 = vmul.f32 %v438, %v437
    %v440 = vmul.f32 0.5, %v439
    %v441 = vsub.f32 1.5, %v440
    %v442 = vmul.f32 %v437, %v441
    %vm443 = vweird.f32 %v412
    %vm444 = vweird.f32 %v437
    %vm445 = vmor %vm443, %vm444
    %v446 = vsel %vm445, %v437, %v442
    %v447 = vrsqrt.pop %v413
    %v448 = vmul.f32 %v447, %v413
    %v449 = vmul.f32 %v448, %v447
    %v450 = vmul.f32 0.5, %v449
    %v451 = vsub.f32 1.5, %v450
    %v452 = vmul.f32 %v447, %v451
    %vm453 = vweird.f32 %v413
    %vm454 = vweird.f32 %v447
    %vm455 = vmor %vm453, %vm454
    %v456 = vsel %vm455, %v447, %v452
    %v457 = vrsqrt.pop %v414
    %v458 = vmul.f32 %v457, %v414
    %v459 = vmul.f32 %v458, %v457
    %v460 = vmul.f32 0.5, %v459
    %v461 = vsub.f32 1.5, %v460
    %v462 = vmul.f32 %v457, %v461
    %vm463 = vweird.f32 %v414
    %vm464 = vweird.f32 %v457
    %vm465 = vmor %vm463, %vm464
    %v466 = vsel %vm465, %v457, %v462
    %v467 = vrsqrt.pop %v415
    %v468 = vmul.f32 %v467, %v415
    %v469 = vmul.f32 %v468, %v467
    %v470 = vmul.f32 0.5, %v469
    %v471 = vsub.f32 1.5, %v470
    %v472 = vmul.f32 %v467, %v471
    %vm473 = vweird.f32 %v415
    %vm474 = vweird.f32 %v467
    %vm475 = vmor %vm473, %vm474
    %v476 = vsel %vm475, %v467, %v472
    %v477 = vrsqrt.pop %v416
    %v478 = vmul.f32 %v477, %v416
    %v479 = vmul.f32 %v478, %v477
    %v480 = vmul.f32 0.5, %v479
    %v481 = vsub.f32 1.5, %v480
    %v482 = vmul.f32 %v477, %v481
    %vm483 = vweird.f32 %v416
    %vm484 = vweird.f32 %v477
    %vm485 = vmor %vm483, %vm484
    %v486 = vsel %vm485, %v477, %v482
    %v487 = vrsqrt.pop %v417
    %v488 = vmul.f32 %v487, %v417
    %v489 = vmul.f32 %v488, %v487
    %v490 = vmul.f32 0.5, %v489
    %v491 = vsub.f32 1.5, %v490
    %v492 = vmul.f32 %v487, %v491
    %vm493 = vweird.f32 %v417
    %vm494 = vweird.f32 %v487
    %vm495 = vmor %vm493, %vm494
    %v496 = vsel %vm495, %v487, %v492
    %v497 = vrsqrt.pop %v418
    %v498 = vmul.f32 %v497, %v418
    %v499 = vmul.f32 %v498, %v497
    %v500 = vmul.f32 0.5, %v499
    %v501 = vsub.f32 1.5, %v500
    %v502 = vmul.f32 %v497, %v501
    %vm503 = vweird.f32 %v418
    %vm504 = vweird.f32 %v497
    %vm505 = vmor %vm503, %vm504
    %v506 = vsel %vm505, %v497, %v502
    %v507 = vrsqrt.pop %v419
    %v508 = vmul.f32 %v507, %v419
    %v509 = vmul.f32 %v508, %v507
    %v510 = vmul.f32 0.5, %v509
    %v511 = vsub.f32 1.5, %v510
    %v512 = vmul.f32 %v507, %v511
    %vm513 = vweird.f32 %v419
    %vm514 = vweird.f32 %v507
    %vm515 = vmor %vm513, %vm514
    %v516 = vsel %vm515, %v507, %v512
    %v517 = vrsqrt.pop %v420
    %v518 = vmul.f32 %v517, %v420
    %v519 = vmul.f32 %v518, %v517
    %v520 = vmul.f32 0.5, %v519
    %v521 = vsub.f32 1.5, %v520
    %v522 = vmul.f32 %v517, %v521
    %vm523 = vweird.f32 %v420
    %vm524 = vweird.f32 %v517
    %vm525 = vmor %vm523, %vm524
    %v526 = vsel %vm525, %v517, %v522
    %v527 = vrsqrt.pop %v421
    %v528 = vmul.f32 %v527, %v421
    %v529 = vmul.f32 %v528, %v527
    %v530 = vmul.f32 0.5, %v529
    %v531 = vsub.f32 1.5, %v530
    %v532 = vmul.f32 %v527, %v531
    %vm533 = vweird.f32 %v421
    %vm534 = vweird.f32 %v527
    %vm535 = vmor %vm533, %vm534
    %v536 = vsel %vm535, %v527, %v532
    %v537 = vrsqrt.pop %v422
    %v538 = vmul.f32 %v537, %v422
    %v539 = vmul.f32 %v538, %v537
    %v540 = vmul.f32 0.5, %v539
    %v541 = vsub.f32 1.5, %v540
    %v542 = vmul.f32 %v537, %v541
    %vm543 = vweird.f32 %v422
    %vm544 = vweird.f32 %v537
    %vm545 = vmor %vm543, %vm544
    %v546 = vsel %vm545, %v537, %v542
    %v547 = vrsqrt.pop %v423
    %v548 = vmul.f32 %v547, %v423
    %v549 = vmul.f32 %v548, %v547
    %v550 = vmul.f32 0.5, %v549
    %v551 = vsub.f32 1.5, %v550
    %v552 = vmul.f32 %v547, %v551
    %vm553 = vweird.f32 %v423
    %vm554 = vweird.f32 %v547
    %vm555 = vmor %vm553, %vm554
    %v556 = vsel %vm555, %v547, %v552
    %v557 = vrsqrt.pop %v424
    %v558 = vmul.f32 %v557, %v424
    %v559 = vmul.f32 %v558, %v557
    %v560 = vmul.f32 0.5, %v559
    %v561 = vsub.f32 1.5, %v560
    %v562 = vmul.f32 %v557, %v561
    %vm563 = vweird.f32 %v424
    %vm564 = vweird.f32 %v557
    %vm565 = vmor %vm563, %vm564
    %v566 = vsel %vm565, %v557, %v562
    %v567 = vrsqrt.pop %v425
    %v568 = vmul.f32 %v567, %v425
    %v569 = vmul.f32 %v568, %v567
    %v570 = vmul.f32 0.5, %v569
    %v571 = vsub.f32 1.5, %v570
    %v572 = vmul.f32 %v567, %v571
    %vm573 = vweird.f32 %v425
    %vm574 = vweird.f32 %v567
    %vm575 = vmor %vm573, %vm574
    %v576 = vsel %vm575, %v567, %v572
    %v577 = vrsqrt.pop %v426
    %v578 = vmul.f32 %v577, %v426
    %v579 = vmul.f32 %v578, %v577
    %v580 = vmul.f32 0.5, %v579
    %v581 = vsub.f32 1.5, %v580
    %v582 = vmul.f32 %v577, %v581
    %vm583 = vweird.f32 %v426
    %vm584 = vweird.f32 %v577
    %vm585 = vmor %vm583, %vm584
    %v586 = vsel %vm585, %v577, %v582
    %v587 = vmul.f32 %v90, %v436
    %v588 = vmul.f32 %v91, %v446
    %v589 = vmul.f32 %v92, %v456
    %v590 = vmul.f32 %v93, %v466
    %v591 = vmul.f32 %v94, %v476
    %v592 = vmul.f32 %v95, %v486
    %v593 = vmul.f32 %v96, %v496
    %v594 = vmul.f32 %v97, %v506
    %v595 = vmul.f32 %v98, %v516
    %v596 = vmul.f32 %v99, %v526
    %v597 = vmul.f32 %v100, %v536
    %v598 = vmul.f32 %v101, %v546
    %v599 = vmul.f32 %v102, %v556
    %v600 = vmul.f32 %v103, %v566
    %v601 = vmul.f32 %v104, %v576
    %v602 = vmul.f32 %v105, %v586
    %603 = vmatpush.xpose.msra.mxu0 %v602
    %604 = vmatpush.xpose.msra.mxu0 %v601
    %605 = vmatpush.xpose.msra.mxu0 %v600
    %606 = vmatpush.xpose.msra.mxu0 %v599
    %607 = vmatpush.xpose.msra.mxu0 %v598
    %608 = vmatpush.xpose.msra.mxu0 %v597
    %609 = vmatpush.xpose.msra.mxu0 %v596
    %610 = vmatpush.xpose.msra.mxu0 %v595
    %611 = vmatpush.xpose.msra.mxu0 %v594
    %612 = vmatpush.xpose.msra.mxu0 %v593
    %613 = vmatpush.xpose.msra.mxu0 %v592
    %614 = vmatpush.xpose.msra.mxu0 %v591
    %615 = vmatpush.xpose.msra.mxu0 %v590
    %616 = vmatpush.xpose.msra.mxu0 %v589
    %617 = vmatpush.xpose.msra.mxu0 %v588
    %618 = vmatpush.xpose.msra.mxu0 %v587
    %619 = vmatmul.f32.gmra.mxu0 %v347
    %v620 = vpop.f32.mrf.mxu0
    %v621 = vadd.f32 0.0, %v620
    %622 = vmatmul.f32.gmra.mxu0 %v348
    %v623 = vpop.f32.mrf.mxu0
    %v624 = vadd.f32 0.0, %v623
    %625 = vmatmul.f32.gmra.mxu0 %v349
    %v626 = vpop.f32.mrf.mxu0
    %v627 = vadd.f32 0.0, %v626
    %628 = vmatmul.f32.gmra.mxu0 %v350
    %v629 = vpop.f32.mrf.mxu0
    %v630 = vadd.f32 0.0, %v629
    %631 = vmatmul.f32.gmra.mxu0 %v351
    %v632 = vpop.f32.mrf.mxu0
    %v633 = vadd.f32 0.0, %v632
    %634 = vmatmul.f32.gmra.mxu0 %v352
    %v635 = vpop.f32.mrf.mxu0
    %v636 = vadd.f32 0.0, %v635
    %637 = vmatmul.f32.gmra.mxu0 %v353
    %v638 = vpop.f32.mrf.mxu0
    %v639 = vadd.f32 0.0, %v638
    %640 = vmatmul.f32.gmra.mxu0 %v354
    %v641 = vpop.f32.mrf.mxu0
    %v642 = vadd.f32 0.0, %v641
    %643 = vmatmul.f32.gmra.mxu0 %v355
    %v644 = vpop.f32.mrf.mxu0
    %v645 = vadd.f32 0.0, %v644
    %646 = vmatmul.f32.gmra.mxu0 %v356
    %v647 = vpop.f32.mrf.mxu0
    %v648 = vadd.f32 0.0, %v647
    %649 = vmatmul.f32.gmra.mxu0 %v357
    %v650 = vpop.f32.mrf.mxu0
    %v651 = vadd.f32 0.0, %v650
    %652 = vmatmul.f32.gmra.mxu0 %v358
    %v653 = vpop.f32.mrf.mxu0
    %v654 = vadd.f32 0.0, %v653
    %655 = vmatmul.f32.gmra.mxu0 %v359
    %v656 = vpop.f32.mrf.mxu0
    %v657 = vadd.f32 0.0, %v656
    %658 = vmatmul.f32.gmra.mxu0 %v360
    %v659 = vpop.f32.mrf.mxu0
    %v660 = vadd.f32 0.0, %v659
    %661 = vmatmul.f32.gmra.mxu0 %v361
    %v662 = vpop.f32.mrf.mxu0
    %v663 = vadd.f32 0.0, %v662
    %664 = vmatmul.f32.gmra.mxu0 %v362
    %v665 = vpop.f32.mrf.mxu0
    %v666 = vadd.f32 0.0, %v665
    %667 = vdwg.mxu0
    %668 = vmatpush.xpose.msra.mxu0 %v362
    %669 = vmatpush.xpose.msra.mxu0 %v361
    %670 = vmatpush.xpose.msra.mxu0 %v360
    %671 = vmatpush.xpose.msra.mxu0 %v359
    %672 = vmatpush.xpose.msra.mxu0 %v358
    %673 = vmatpush.xpose.msra.mxu0 %v357
    %674 = vmatpush.xpose.msra.mxu0 %v356
    %675 = vmatpush.xpose.msra.mxu0 %v355
    %676 = vmatpush.xpose.msra.mxu0 %v354
    %677 = vmatpush.xpose.msra.mxu0 %v353
    %678 = vmatpush.xpose.msra.mxu0 %v352
    %679 = vmatpush.xpose.msra.mxu0 %v351
    %680 = vmatpush.xpose.msra.mxu0 %v350
    %681 = vmatpush.xpose.msra.mxu0 %v349
    %682 = vmatpush.xpose.msra.mxu0 %v348
    %683 = vmatpush.xpose.msra.mxu0 %v347
    %684 = vmatmul.f32.gmra.mxu0 %v587
    %v685 = vpop.f32.mrf.mxu0
    %v686 = vadd.f32 0.0, %v685
    %687 = vmatmul.f32.gmra.mxu0 %v588
    %v688 = vpop.f32.mrf.mxu0
    %v689 = vadd.f32 0.0, %v688
    %690 = vmatmul.f32.gmra.mxu0 %v589
    %v691 = vpop.f32.mrf.mxu0
    %v692 = vadd.f32 0.0, %v691
    %693 = vmatmul.f32.gmra.mxu0 %v590
    %v694 = vpop.f32.mrf.mxu0
    %v695 = vadd.f32 0.0, %v694
    %696 = vmatmul.f32.gmra.mxu0 %v591
    %v697 = vpop.f32.mrf.mxu0
    %v698 = vadd.f32 0.0, %v697
    %699 = vmatmul.f32.gmra.mxu0 %v592
    %v700 = vpop.f32.mrf.mxu0
    %v701 = vadd.f32 0.0, %v700
    %702 = vmatmul.f32.gmra.mxu0 %v593
    %v703 = vpop.f32.mrf.mxu0
    %v704 = vadd.f32 0.0, %v703
    %705 = vmatmul.f32.gmra.mxu0 %v594
    %v706 = vpop.f32.mrf.mxu0
    %v707 = vadd.f32 0.0, %v706
    %708 = vmatmul.f32.gmra.mxu0 %v595
    %v709 = vpop.f32.mrf.mxu0
    %v710 = vadd.f32 0.0, %v709
    %711 = vmatmul.f32.gmra.mxu0 %v596
    %v712 = vpop.f32.mrf.mxu0
    %v713 = vadd.f32 0.0, %v712
    %714 = vmatmul.f32.gmra.mxu0 %v597
    %v715 = vpop.f32.mrf.mxu0
    %v716 = vadd.f32 0.0, %v715
    %717 = vmatmul.f32.gmra.mxu0 %v598
    %v718 = vpop.f32.mrf.mxu0
    %v719 = vadd.f32 0.0, %v718
    %720 = vmatmul.f32.gmra.mxu0 %v599
    %v721 = vpop.f32.mrf.mxu0
    %v722 = vadd.f32 0.0, %v721
    %723 = vmatmul.f32.gmra.mxu0 %v600
    %v724 = vpop.f32.mrf.mxu0
    %v725 = vadd.f32 0.0, %v724
    %726 = vmatmul.f32.gmra.mxu0 %v601
    %v727 = vpop.f32.mrf.mxu0
    %v728 = vadd.f32 0.0, %v727
    %729 = vmatmul.f32.gmra.mxu0 %v602
    %v730 = vpop.f32.mrf.mxu0
    %v731 = vadd.f32 0.0, %v730
    %732 = vdwg.mxu0
    %733 = vst [vmem:[#allocation9] sm:$0xff] %v621
    %734 = vst [vmem:[#allocation9 + $0x8] sm:$0xff] %v624
    %735 = vst [vmem:[#allocation9 + $0x10] sm:$0xff] %v627
    %736 = vst [vmem:[#allocation9 + $0x18] sm:$0xff] %v630
    %737 = vst [vmem:[#allocation9 + $0x20] sm:$0xff] %v633
    %738 = vst [vmem:[#allocation9 + $0x28] sm:$0xff] %v636
    %739 = vst [vmem:[#allocation9 + $0x30] sm:$0xff] %v639
    %740 = vst [vmem:[#allocation9 + $0x38] sm:$0xff] %v642
    %741 = vst [vmem:[#allocation9 + $0x40] sm:$0xff] %v645
    %742 = vst [vmem:[#allocation9 + $0x48] sm:$0xff] %v648
    %743 = vst [vmem:[#allocation9 + $0x50] sm:$0xff] %v651
    %744 = vst [vmem:[#allocation9 + $0x58] sm:$0xff] %v654
    %745 = vst [vmem:[#allocation9 + $0x60] sm:$0xff] %v657
    %746 = vst [vmem:[#allocation9 + $0x68] sm:$0xff] %v660
    %747 = vst [vmem:[#allocation9 + $0x70] sm:$0xff] %v663
    %748 = vst [vmem:[#allocation9 + $0x78] sm:$0xff] %v666
    %749 = vst [vmem:[#allocation10] sm:$0xff] %v686
    %750 = vst [vmem:[#allocation10 + $0x8] sm:$0xff] %v689
    %751 = vst [vmem:[#allocation10 + $0x10] sm:$0xff] %v692
    %752 = vst [vmem:[#allocation10 + $0x18] sm:$0xff] %v695
    %753 = vst [vmem:[#allocation10 + $0x20] sm:$0xff] %v698
    %754 = vst [vmem:[#allocation10 + $0x28] sm:$0xff] %v701
    %755 = vst [vmem:[#allocation10 + $0x30] sm:$0xff] %v704
    %756 = vst [vmem:[#allocation10 + $0x38] sm:$0xff] %v707
    %757 = vst [vmem:[#allocation10 + $0x40] sm:$0xff] %v710
    %758 = vst [vmem:[#allocation10 + $0x48] sm:$0xff] %v713
    %759 = vst [vmem:[#allocation10 + $0x50] sm:$0xff] %v716
    %760 = vst [vmem:[#allocation10 + $0x58] sm:$0xff] %v719
    %761 = vst [vmem:[#allocation10 + $0x60] sm:$0xff] %v722
    %762 = vst [vmem:[#allocation10 + $0x68] sm:$0xff] %v725
    %763 = vst [vmem:[#allocation10 + $0x70] sm:$0xff] %v728
    %764 = vst [vmem:[#allocation10 + $0x78] sm:$0xff] %v731
    %v765 = vlaneseq
    %v766 = vand.u32 %v765, 127
    %v767 = vlaneseq
    %v768 = vshrl.u32 %v767, 7
    %v769 = vadd.s32 %v768, 8
    %v770 = vadd.s32 %v768, 16
    %v771 = vadd.s32 %v768, 24
    %v772 = vadd.s32 %v768, 32
    %v773 = vadd.s32 %v768, 40
    %v774 = vadd.s32 %v768, 48
    %v775 = vadd.s32 %v768, 56
    %v776 = vadd.s32 %v768, 64
    %v777 = vadd.s32 %v768, 72
    %v778 = vadd.s32 %v768, 80
    %v779 = vadd.s32 %v768, 88
    %v780 = vadd.s32 %v768, 96
    %v781 = vadd.s32 %v768, 104
    %v782 = vadd.s32 %v768, 112
    %v783 = vadd.s32 %v768, 120
    %v784 = vstv %s56
    %vm785 = vcmp.lt.s32.totalorder %v766, %v784
    %vm786 = vcmp.lt.s32.totalorder %v768, %v784
    %vm787 = vcmp.lt.s32.totalorder %v769, %v784
    %vm788 = vcmp.lt.s32.totalorder %v770, %v784
    %vm789 = vcmp.lt.s32.totalorder %v771, %v784
    %vm790 = vcmp.lt.s32.totalorder %v772, %v784
    %vm791 = vcmp.lt.s32.totalorder %v773, %v784
    %vm792 = vcmp.lt.s32.totalorder %v774, %v784
    %vm793 = vcmp.lt.s32.totalorder %v775, %v784
    %vm794 = vcmp.lt.s32.totalorder %v776, %v784
    %vm795 = vcmp.lt.s32.totalorder %v777, %v784
    %vm796 = vcmp.lt.s32.totalorder %v778, %v784
    %vm797 = vcmp.lt.s32.totalorder %v779, %v784
    %vm798 = vcmp.lt.s32.totalorder %v780, %v784
    %vm799 = vcmp.lt.s32.totalorder %v781, %v784
    %vm800 = vcmp.lt.s32.totalorder %v782, %v784
    %vm801 = vcmp.lt.s32.totalorder %v783, %v784
    %v802 = vmul.f32 %v347, %v587
    %v803 = vmul.f32 %v348, %v588
    %v804 = vmul.f32 %v349, %v589
    %v805 = vmul.f32 %v350, %v590
    %v806 = vmul.f32 %v351, %v591
    %v807 = vmul.f32 %v352, %v592
    %v808 = vmul.f32 %v353, %v593
    %v809 = vmul.f32 %v354, %v594
    %v810 = vmul.f32 %v355, %v595
    %v811 = vmul.f32 %v356, %v596
    %v812 = vmul.f32 %v357, %v597
    %v813 = vmul.f32 %v358, %v598
    %v814 = vmul.f32 %v359, %v599
    %v815 = vmul.f32 %v360, %v600
    %v816 = vmul.f32 %v361, %v601
    %v817 = vmul.f32 %v362, %v602
    %818 = vadd.xlane.f32.xlu0 %v802
    %v819 = vpop.xlane.xlu0 %818
    %820 = vadd.xlane.f32.xlu0 %v803
    %v821 = vpop.xlane.xlu0 %820
    %822 = vadd.xlane.f32.xlu0 %v804
    %v823 = vpop.xlane.xlu0 %822
    %824 = vadd.xlane.f32.xlu0 %v805
    %v825 = vpop.xlane.xlu0 %824
    %826 = vadd.xlane.f32.xlu0 %v806
    %v827 = vpop.xlane.xlu0 %826
    %828 = vadd.xlane.f32.xlu0 %v807
    %v829 = vpop.xlane.xlu0 %828
    %830 = vadd.xlane.f32.xlu0 %v808
    %v831 = vpop.xlane.xlu0 %830
    %832 = vadd.xlane.f32.xlu0 %v809
    %v833 = vpop.xlane.xlu0 %832
    %834 = vadd.xlane.f32.xlu0 %v810
    %v835 = vpop.xlane.xlu0 %834
    %836 = vadd.xlane.f32.xlu0 %v811
    %v837 = vpop.xlane.xlu0 %836
    %838 = vadd.xlane.f32.xlu0 %v812
    %v839 = vpop.xlane.xlu0 %838
    %840 = vadd.xlane.f32.xlu0 %v813
    %v841 = vpop.xlane.xlu0 %840
    %842 = vadd.xlane.f32.xlu0 %v814
    %v843 = vpop.xlane.xlu0 %842
    %844 = vadd.xlane.f32.xlu0 %v815
    %v845 = vpop.xlane.xlu0 %844
    %846 = vadd.xlane.f32.xlu0 %v816
    %v847 = vpop.xlane.xlu0 %846
    %848 = vadd.xlane.f32.xlu0 %v817
    %v849 = vpop.xlane.xlu0 %848
    %s850 = scvt.s32.f32 %s56
    %v851 = vsel %vm785, %v621, -1e+30
    %v852 = vsel %vm785, %v624, -1e+30
    %v853 = vsel %vm785, %v627, -1e+30
    %v854 = vsel %vm785, %v630, -1e+30
    %v855 = vsel %vm785, %v633, -1e+30
    %v856 = vsel %vm785, %v636, -1e+30
    %v857 = vsel %vm785, %v639, -1e+30
    %v858 = vsel %vm785, %v642, -1e+30
    %v859 = vsel %vm785, %v645, -1e+30
    %v860 = vsel %vm785, %v648, -1e+30
    %v861 = vsel %vm785, %v651, -1e+30
    %v862 = vsel %vm785, %v654, -1e+30
    %v863 = vsel %vm785, %v657, -1e+30
    %v864 = vsel %vm785, %v660, -1e+30
    %v865 = vsel %vm785, %v663, -1e+30
    %v866 = vsel %vm785, %v666, -1e+30
    %867 = vmax.xlane.f32.xlu0 %v851
    %v868 = vpop.xlane.xlu0 %867
    %869 = vmax.xlane.f32.xlu0 %v852
    %v870 = vpop.xlane.xlu0 %869
    %871 = vmax.xlane.f32.xlu0 %v853
    %v872 = vpop.xlane.xlu0 %871
    %873 = vmax.xlane.f32.xlu0 %v854
    %v874 = vpop.xlane.xlu0 %873
    %875 = vmax.xlane.f32.xlu0 %v855
    %v876 = vpop.xlane.xlu0 %875
    %877 = vmax.xlane.f32.xlu0 %v856
    %v878 = vpop.xlane.xlu0 %877
    %879 = vmax.xlane.f32.xlu0 %v857
    %v880 = vpop.xlane.xlu0 %879
    %881 = vmax.xlane.f32.xlu0 %v858
    %v882 = vpop.xlane.xlu0 %881
    %883 = vmax.xlane.f32.xlu0 %v859
    %v884 = vpop.xlane.xlu0 %883
    %885 = vmax.xlane.f32.xlu0 %v860
    %v886 = vpop.xlane.xlu0 %885
    %887 = vmax.xlane.f32.xlu0 %v861
    %v888 = vpop.xlane.xlu0 %887
    %889 = vmax.xlane.f32.xlu0 %v862
    %v890 = vpop.xlane.xlu0 %889
    %891 = vmax.xlane.f32.xlu0 %v863
    %v892 = vpop.xlane.xlu0 %891
    %893 = vmax.xlane.f32.xlu0 %v864
    %v894 = vpop.xlane.xlu0 %893
    %895 = vmax.xlane.f32.xlu0 %v865
    %v896 = vpop.xlane.xlu0 %895
    %897 = vmax.xlane.f32.xlu0 %v866
    %v898 = vpop.xlane.xlu0 %897
    %v899 = vsub.f32 %v851, %v868
    %v900 = vsub.f32 %v852, %v870
    %v901 = vsub.f32 %v853, %v872
    %v902 = vsub.f32 %v854, %v874
    %v903 = vsub.f32 %v855, %v876
    %v904 = vsub.f32 %v856, %v878
    %v905 = vsub.f32 %v857, %v880
    %v906 = vsub.f32 %v858, %v882
    %v907 = vsub.f32 %v859, %v884
    %v908 = vsub.f32 %v860, %v886
    %v909 = vsub.f32 %v861, %v888
    %v910 = vsub.f32 %v862, %v890
    %v911 = vsub.f32 %v863, %v892
    %v912 = vsub.f32 %v864, %v894
    %v913 = vsub.f32 %v865, %v896
    %v914 = vsub.f32 %v866, %v898
    %v915 = vmul.f32 %v899, 1.442695
    %v916 = vpow.pop %v915
    %v917 = vmul.f32 %v900, 1.442695
    %v918 = vpow.pop %v917
    %v919 = vmul.f32 %v901, 1.442695
    %v920 = vpow.pop %v919
    %v921 = vmul.f32 %v902, 1.442695
    %v922 = vpow.pop %v921
    %v923 = vmul.f32 %v903, 1.442695
    %v924 = vpow.pop %v923
    %v925 = vmul.f32 %v904, 1.442695
    %v926 = vpow.pop %v925
    %v927 = vmul.f32 %v905, 1.442695
    %v928 = vpow.pop %v927
    %v929 = vmul.f32 %v906, 1.442695
    %v930 = vpow.pop %v929
    %v931 = vmul.f32 %v907, 1.442695
    %v932 = vpow.pop %v931
    %v933 = vmul.f32 %v908, 1.442695
    %v934 = vpow.pop %v933
    %v935 = vmul.f32 %v909, 1.442695
    %v936 = vpow.pop %v935
    %v937 = vmul.f32 %v910, 1.442695
    %v938 = vpow.pop %v937
    %v939 = vmul.f32 %v911, 1.442695
    %v940 = vpow.pop %v939
    %v941 = vmul.f32 %v912, 1.442695
    %v942 = vpow.pop %v941
    %v943 = vmul.f32 %v913, 1.442695
    %v944 = vpow.pop %v943
    %v945 = vmul.f32 %v914, 1.442695
    %v946 = vpow.pop %v945
    %947 = vadd.xlane.f32.xlu0 %v916
    %v948 = vpop.xlane.xlu0 %947
    %949 = vadd.xlane.f32.xlu0 %v918
    %v950 = vpop.xlane.xlu0 %949
    %951 = vadd.xlane.f32.xlu0 %v920
    %v952 = vpop.xlane.xlu0 %951
    %953 = vadd.xlane.f32.xlu0 %v922
    %v954 = vpop.xlane.xlu0 %953
    %955 = vadd.xlane.f32.xlu0 %v924
    %v956 = vpop.xlane.xlu0 %955
    %957 = vadd.xlane.f32.xlu0 %v926
    %v958 = vpop.xlane.xlu0 %957
    %959 = vadd.xlane.f32.xlu0 %v928
    %v960 = vpop.xlane.xlu0 %959
    %961 = vadd.xlane.f32.xlu0 %v930
    %v962 = vpop.xlane.xlu0 %961
    %963 = vadd.xlane.f32.xlu0 %v932
    %v964 = vpop.xlane.xlu0 %963
    %965 = vadd.xlane.f32.xlu0 %v934
    %v966 = vpop.xlane.xlu0 %965
    %967 = vadd.xlane.f32.xlu0 %v936
    %v968 = vpop.xlane.xlu0 %967
    %969 = vadd.xlane.f32.xlu0 %v938
    %v970 = vpop.xlane.xlu0 %969
    %971 = vadd.xlane.f32.xlu0 %v940
    %v972 = vpop.xlane.xlu0 %971
    %973 = vadd.xlane.f32.xlu0 %v942
    %v974 = vpop.xlane.xlu0 %973
    %975 = vadd.xlane.f32.xlu0 %v944
    %v976 = vpop.xlane.xlu0 %975
    %977 = vadd.xlane.f32.xlu0 %v946
    %v978 = vpop.xlane.xlu0 %977
    %v979 = vlog2.pop %v948
    %v980 = vmul.f32 %v979, 0.6931472
    %v981 = vlog2.pop %v950
    %v982 = vmul.f32 %v981, 0.6931472
    %v983 = vlog2.pop %v952
    %v984 = vmul.f32 %v983, 0.6931472
    %v985 = vlog2.pop %v954
    %v986 = vmul.f32 %v985, 0.6931472
    %v987 = vlog2.pop %v956
    %v988 = vmul.f32 %v987, 0.6931472
    %v989 = vlog2.pop %v958
    %v990 = vmul.f32 %v989, 0.6931472
    %v991 = vlog2.pop %v960
    %v992 = vmul.f32 %v991, 0.6931472
    %v993 = vlog2.pop %v962
    %v994 = vmul.f32 %v993, 0.6931472
    %v995 = vlog2.pop %v964
    %v996 = vmul.f32 %v995, 0.6931472
    %v997 = vlog2.pop %v966
    %v998 = vmul.f32 %v997, 0.6931472
    %v999 = vlog2.pop %v968
    %v1000 = vmul.f32 %v999, 0.6931472
    %v1001 = vlog2.pop %v970
    %v1002 = vmul.f32 %v1001, 0.6931472
    %v1003 = vlog2.pop %v972
    %v1004 = vmul.f32 %v1003, 0.6931472
    %v1005 = vlog2.pop %v974
    %v1006 = vmul.f32 %v1005, 0.6931472
    %v1007 = vlog2.pop %v976
    %v1008 = vmul.f32 %v1007, 0.6931472
    %v1009 = vlog2.pop %v978
    %v1010 = vmul.f32 %v1009, 0.6931472
    %v1011 = vadd.f32 %v868, %v980
    %v1012 = vadd.f32 %v870, %v982
    %v1013 = vadd.f32 %v872, %v984
    %v1014 = vadd.f32 %v874, %v986
    %v1015 = vadd.f32 %v876, %v988
    %v1016 = vadd.f32 %v878, %v990
    %v1017 = vadd.f32 %v880, %v992
    %v1018 = vadd.f32 %v882, %v994
    %v1019 = vadd.f32 %v884, %v996
    %v1020 = vadd.f32 %v886, %v998
    %v1021 = vadd.f32 %v888, %v1000
    %v1022 = vadd.f32 %v890, %v1002
    %v1023 = vadd.f32 %v892, %v1004
    %v1024 = vadd.f32 %v894, %v1006
    %v1025 = vadd.f32 %v896, %v1008
    %v1026 = vadd.f32 %v898, %v1010
    %v1027 = vsub.f32 %v1011, %v819
    %v1028 = vsub.f32 %v1012, %v821
    %v1029 = vsub.f32 %v1013, %v823
    %v1030 = vsub.f32 %v1014, %v825
    %v1031 = vsub.f32 %v1015, %v827
    %v1032 = vsub.f32 %v1016, %v829
    %v1033 = vsub.f32 %v1017, %v831
    %v1034 = vsub.f32 %v1018, %v833
    %v1035 = vsub.f32 %v1019, %v835
    %v1036 = vsub.f32 %v1020, %v837
    %v1037 = vsub.f32 %v1021, %v839
    %v1038 = vsub.f32 %v1022, %v841
    %v1039 = vsub.f32 %v1023, %v843
    %v1040 = vsub.f32 %v1024, %v845
    %v1041 = vsub.f32 %v1025, %v847
    %v1042 = vsub.f32 %v1026, %v849
    %v1043 = vsel %vm786, %v1027, 0.0
    %v1044 = vsel %vm787, %v1028, 0.0
    %v1045 = vsel %vm788, %v1029, 0.0
    %v1046 = vsel %vm789, %v1030, 0.0
    %v1047 = vsel %vm790, %v1031, 0.0
    %v1048 = vsel %vm791, %v1032, 0.0
    %v1049 = vsel %vm792, %v1033, 0.0
    %v1050 = vsel %vm793, %v1034, 0.0
    %v1051 = vsel %vm794, %v1035, 0.0
    %v1052 = vsel %vm795, %v1036, 0.0
    %v1053 = vsel %vm796, %v1037, 0.0
    %v1054 = vsel %vm797, %v1038, 0.0
    %v1055 = vsel %vm798, %v1039, 0.0
    %v1056 = vsel %vm799, %v1040, 0.0
    %v1057 = vsel %vm800, %v1041, 0.0
    %v1058 = vsel %vm801, %v1042, 0.0
    %vm1059 = vcmask 7168
    %v1060 = vsel %vm1059, %v1043, 0.0
    %v1061 = vsel %vm1059, %v1044, 0.0
    %v1062 = vadd.f32 %v1060, %v1061
    %v1063 = vsel %vm1059, %v1045, 0.0
    %v1064 = vadd.f32 %v1062, %v1063
    %v1065 = vsel %vm1059, %v1046, 0.0
    %v1066 = vadd.f32 %v1064, %v1065
    %v1067 = vsel %vm1059, %v1047, 0.0
    %v1068 = vadd.f32 %v1066, %v1067
    %v1069 = vsel %vm1059, %v1048, 0.0
    %v1070 = vadd.f32 %v1068, %v1069
    %v1071 = vsel %vm1059, %v1049, 0.0
    %v1072 = vadd.f32 %v1070, %v1071
    %v1073 = vsel %vm1059, %v1050, 0.0
    %v1074 = vadd.f32 %v1072, %v1073
    %v1075 = vsel %vm1059, %v1051, 0.0
    %v1076 = vadd.f32 %v1074, %v1075
    %v1077 = vsel %vm1059, %v1052, 0.0
    %v1078 = vadd.f32 %v1076, %v1077
    %v1079 = vsel %vm1059, %v1053, 0.0
    %v1080 = vadd.f32 %v1078, %v1079
    %v1081 = vsel %vm1059, %v1054, 0.0
    %v1082 = vadd.f32 %v1080, %v1081
    %v1083 = vsel %vm1059, %v1055, 0.0
    %v1084 = vadd.f32 %v1082, %v1083
    %v1085 = vsel %vm1059, %v1056, 0.0
    %v1086 = vadd.f32 %v1084, %v1085
    %v1087 = vsel %vm1059, %v1057, 0.0
    %v1088 = vadd.f32 %v1086, %v1087
    %v1089 = vsel %vm1059, %v1058, 0.0
    %v1090 = vadd.f32 %v1088, %v1089
    %1091 = vadd.xlane.f32.xlu0 %v1090
    %v1092 = vpop.xlane.xlu0 %1091
    %v1093 = vrot.slane %v1092, 4
    %v1094 = vadd.f32 %v1092, %v1093
    %v1095 = vrot.slane %v1094, 2
    %v1096 = vadd.f32 %v1094, %v1095
    %v1097 = vrot.slane %v1096, 1
    %v1098 = vadd.f32 %v1096, %v1097
    %s1099 = vtos %v1098
    %v1100 = vsel %vm785, %v686, -1e+30
    %v1101 = vsel %vm785, %v689, -1e+30
    %v1102 = vsel %vm785, %v692, -1e+30
    %v1103 = vsel %vm785, %v695, -1e+30
    %v1104 = vsel %vm785, %v698, -1e+30
    %v1105 = vsel %vm785, %v701, -1e+30
    %v1106 = vsel %vm785, %v704, -1e+30
    %v1107 = vsel %vm785, %v707, -1e+30
    %v1108 = vsel %vm785, %v710, -1e+30
    %v1109 = vsel %vm785, %v713, -1e+30
    %v1110 = vsel %vm785, %v716, -1e+30
    %v1111 = vsel %vm785, %v719, -1e+30
    %v1112 = vsel %vm785, %v722, -1e+30
    %v1113 = vsel %vm785, %v725, -1e+30
    %v1114 = vsel %vm785, %v728, -1e+30
    %v1115 = vsel %vm785, %v731, -1e+30
    %1116 = vmax.xlane.f32.xlu0 %v1100
    %v1117 = vpop.xlane.xlu0 %1116
    %1118 = vmax.xlane.f32.xlu0 %v1101
    %v1119 = vpop.xlane.xlu0 %1118
    %1120 = vmax.xlane.f32.xlu0 %v1102
    %v1121 = vpop.xlane.xlu0 %1120
    %1122 = vmax.xlane.f32.xlu0 %v1103
    %v1123 = vpop.xlane.xlu0 %1122
    %1124 = vmax.xlane.f32.xlu0 %v1104
    %v1125 = vpop.xlane.xlu0 %1124
    %1126 = vmax.xlane.f32.xlu0 %v1105
    %v1127 = vpop.xlane.xlu0 %1126
    %1128 = vmax.xlane.f32.xlu0 %v1106
    %v1129 = vpop.xlane.xlu0 %1128
    %1130 = vmax.xlane.f32.xlu0 %v1107
    %v1131 = vpop.xlane.xlu0 %1130
    %1132 = vmax.xlane.f32.xlu0 %v1108
    %v1133 = vpop.xlane.xlu0 %1132
    %1134 = vmax.xlane.f32.xlu0 %v1109
    %v1135 = vpop.xlane.xlu0 %1134
    %1136 = vmax.xlane.f32.xlu0 %v1110
    %v1137 = vpop.xlane.xlu0 %1136
    %1138 = vmax.xlane.f32.xlu0 %v1111
    %v1139 = vpop.xlane.xlu0 %1138
    %1140 = vmax.xlane.f32.xlu0 %v1112
    %v1141 = vpop.xlane.xlu0 %1140
    %1142 = vmax.xlane.f32.xlu0 %v1113
    %v1143 = vpop.xlane.xlu0 %1142
    %1144 = vmax.xlane.f32.xlu0 %v1114
    %v1145 = vpop.xlane.xlu0 %1144
    %1146 = vmax.xlane.f32.xlu0 %v1115
    %v1147 = vpop.xlane.xlu0 %1146
    %v1148 = vsub.f32 %v1100, %v1117
    %v1149 = vsub.f32 %v1101, %v1119
    %v1150 = vsub.f32 %v1102, %v1121
    %v1151 = vsub.f32 %v1103, %v1123
    %v1152 = vsub.f32 %v1104, %v1125
    %v1153 = vsub.f32 %v1105, %v1127
    %v1154 = vsub.f32 %v1106, %v1129
    %v1155 = vsub.f32 %v1107, %v1131
    %v1156 = vsub.f32 %v1108, %v1133
    %v1157 = vsub.f32 %v1109, %v1135
    %v1158 = vsub.f32 %v1110, %v1137
    %v1159 = vsub.f32 %v1111, %v1139
    %v1160 = vsub.f32 %v1112, %v1141
    %v1161 = vsub.f32 %v1113, %v1143
    %v1162 = vsub.f32 %v1114, %v1145
    %v1163 = vsub.f32 %v1115, %v1147
    %v1164 = vmul.f32 %v1148, 1.442695
    %v1165 = vpow.pop %v1164
    %v1166 = vmul.f32 %v1149, 1.442695
    %v1167 = vpow.pop %v1166
    %v1168 = vmul.f32 %v1150, 1.442695
    %v1169 = vpow.pop %v1168
    %v1170 = vmul.f32 %v1151, 1.442695
    %v1171 = vpow.pop %v1170
    %v1172 = vmul.f32 %v1152, 1.442695
    %v1173 = vpow.pop %v1172
    %v1174 = vmul.f32 %v1153, 1.442695
    %v1175 = vpow.pop %v1174
    %v1176 = vmul.f32 %v1154, 1.442695
    %v1177 = vpow.pop %v1176
    %v1178 = vmul.f32 %v1155, 1.442695
    %v1179 = vpow.pop %v1178
    %v1180 = vmul.f32 %v1156, 1.442695
    %v1181 = vpow.pop %v1180
    %v1182 = vmul.f32 %v1157, 1.442695
    %v1183 = vpow.pop %v1182
    %v1184 = vmul.f32 %v1158, 1.442695
    %v1185 = vpow.pop %v1184
    %v1186 = vmul.f32 %v1159, 1.442695
    %v1187 = vpow.pop %v1186
    %v1188 = vmul.f32 %v1160, 1.442695
    %v1189 = vpow.pop %v1188
    %v1190 = vmul.f32 %v1161, 1.442695
    %v1191 = vpow.pop %v1190
    %v1192 = vmul.f32 %v1162, 1.442695
    %v1193 = vpow.pop %v1192
    %v1194 = vmul.f32 %v1163, 1.442695
    %v1195 = vpow.pop %v1194
    %1196 = vadd.xlane.f32.xlu0 %v1165
    %v1197 = vpop.xlane.xlu0 %1196
    %1198 = vadd.xlane.f32.xlu0 %v1167
    %v1199 = vpop.xlane.xlu0 %1198
    %1200 = vadd.xlane.f32.xlu0 %v1169
    %v1201 = vpop.xlane.xlu0 %1200
    %1202 = vadd.xlane.f32.xlu0 %v1171
    %v1203 = vpop.xlane.xlu0 %1202
    %1204 = vadd.xlane.f32.xlu0 %v1173
    %v1205 = vpop.xlane.xlu0 %1204
    %1206 = vadd.xlane.f32.xlu0 %v1175
    %v1207 = vpop.xlane.xlu0 %1206
    %1208 = vadd.xlane.f32.xlu0 %v1177
    %v1209 = vpop.xlane.xlu0 %1208
    %1210 = vadd.xlane.f32.xlu0 %v1179
    %v1211 = vpop.xlane.xlu0 %1210
    %1212 = vadd.xlane.f32.xlu0 %v1181
    %v1213 = vpop.xlane.xlu0 %1212
    %1214 = vadd.xlane.f32.xlu0 %v1183
    %v1215 = vpop.xlane.xlu0 %1214
    %1216 = vadd.xlane.f32.xlu0 %v1185
    %v1217 = vpop.xlane.xlu0 %1216
    %1218 = vadd.xlane.f32.xlu0 %v1187
    %v1219 = vpop.xlane.xlu0 %1218
    %1220 = vadd.xlane.f32.xlu0 %v1189
    %v1221 = vpop.xlane.xlu0 %1220
    %1222 = vadd.xlane.f32.xlu0 %v1191
    %v1223 = vpop.xlane.xlu0 %1222
    %1224 = vadd.xlane.f32.xlu0 %v1193
    %v1225 = vpop.xlane.xlu0 %1224
    %1226 = vadd.xlane.f32.xlu0 %v1195
    %v1227 = vpop.xlane.xlu0 %1226
    %v1228 = vlog2.pop %v1197
    %v1229 = vmul.f32 %v1228, 0.6931472
    %v1230 = vlog2.pop %v1199
    %v1231 = vmul.f32 %v1230, 0.6931472
    %v1232 = vlog2.pop %v1201
    %v1233 = vmul.f32 %v1232, 0.6931472
    %v1234 = vlog2.pop %v1203
    %v1235 = vmul.f32 %v1234, 0.6931472
    %v1236 = vlog2.pop %v1205
    %v1237 = vmul.f32 %v1236, 0.6931472
    %v1238 = vlog2.pop %v1207
    %v1239 = vmul.f32 %v1238, 0.6931472
    %v1240 = vlog2.pop %v1209
    %v1241 = vmul.f32 %v1240, 0.6931472
    %v1242 = vlog2.pop %v1211
    %v1243 = vmul.f32 %v1242, 0.6931472
    %v1244 = vlog2.pop %v1213
    %v1245 = vmul.f32 %v1244, 0.6931472
    %v1246 = vlog2.pop %v1215
    %v1247 = vmul.f32 %v1246, 0.6931472
    %v1248 = vlog2.pop %v1217
    %v1249 = vmul.f32 %v1248, 0.6931472
    %v1250 = vlog2.pop %v1219
    %v1251 = vmul.f32 %v1250, 0.6931472
    %v1252 = vlog2.pop %v1221
    %v1253 = vmul.f32 %v1252, 0.6931472
    %v1254 = vlog2.pop %v1223
    %v1255 = vmul.f32 %v1254, 0.6931472
    %v1256 = vlog2.pop %v1225
    %v1257 = vmul.f32 %v1256, 0.6931472
    %v1258 = vlog2.pop %v1227
    %v1259 = vmul.f32 %v1258, 0.6931472
    %v1260 = vadd.f32 %v1117, %v1229
    %v1261 = vadd.f32 %v1119, %v1231
    %v1262 = vadd.f32 %v1121, %v1233
    %v1263 = vadd.f32 %v1123, %v1235
    %v1264 = vadd.f32 %v1125, %v1237
    %v1265 = vadd.f32 %v1127, %v1239
    %v1266 = vadd.f32 %v1129, %v1241
    %v1267 = vadd.f32 %v1131, %v1243
    %v1268 = vadd.f32 %v1133, %v1245
    %v1269 = vadd.f32 %v1135, %v1247
    %v1270 = vadd.f32 %v1137, %v1249
    %v1271 = vadd.f32 %v1139, %v1251
    %v1272 = vadd.f32 %v1141, %v1253
    %v1273 = vadd.f32 %v1143, %v1255
    %v1274 = vadd.f32 %v1145, %v1257
    %v1275 = vadd.f32 %v1147, %v1259
    %v1276 = vsub.f32 %v1260, %v819
    %v1277 = vsub.f32 %v1261, %v821
    %v1278 = vsub.f32 %v1262, %v823
    %v1279 = vsub.f32 %v1263, %v825
    %v1280 = vsub.f32 %v1264, %v827
    %v1281 = vsub.f32 %v1265, %v829
    %v1282 = vsub.f32 %v1266, %v831
    %v1283 = vsub.f32 %v1267, %v833
    %v1284 = vsub.f32 %v1268, %v835
    %v1285 = vsub.f32 %v1269, %v837
    %v1286 = vsub.f32 %v1270, %v839
    %v1287 = vsub.f32 %v1271, %v841
    %v1288 = vsub.f32 %v1272, %v843
    %v1289 = vsub.f32 %v1273, %v845
    %v1290 = vsub.f32 %v1274, %v847
    %v1291 = vsub.f32 %v1275, %v849
    %v1292 = vsel %vm786, %v1276, 0.0
    %v1293 = vsel %vm787, %v1277, 0.0
    %v1294 = vsel %vm788, %v1278, 0.0
    %v1295 = vsel %vm789, %v1279, 0.0
    %v1296 = vsel %vm790, %v1280, 0.0
    %v1297 = vsel %vm791, %v1281, 0.0
    %v1298 = vsel %vm792, %v1282, 0.0
    %v1299 = vsel %vm793, %v1283, 0.0
    %v1300 = vsel %vm794, %v1284, 0.0
    %v1301 = vsel %vm795, %v1285, 0.0
    %v1302 = vsel %vm796, %v1286, 0.0
    %v1303 = vsel %vm797, %v1287, 0.0
    %v1304 = vsel %vm798, %v1288, 0.0
    %v1305 = vsel %vm799, %v1289, 0.0
    %v1306 = vsel %vm800, %v1290, 0.0
    %v1307 = vsel %vm801, %v1291, 0.0
    %v1308 = vsel %vm1059, %v1292, 0.0
    %v1309 = vsel %vm1059, %v1293, 0.0
    %v1310 = vadd.f32 %v1308, %v1309
    %v1311 = vsel %vm1059, %v1294, 0.0
    %v1312 = vadd.f32 %v1310, %v1311
    %v1313 = vsel %vm1059, %v1295, 0.0
    %v1314 = vadd.f32 %v1312, %v1313
    %v1315 = vsel %vm1059, %v1296, 0.0
    %v1316 = vadd.f32 %v1314, %v1315
    %v1317 = vsel %vm1059, %v1297, 0.0
    %v1318 = vadd.f32 %v1316, %v1317
    %v1319 = vsel %vm1059, %v1298, 0.0
    %v1320 = vadd.f32 %v1318, %v1319
    %v1321 = vsel %vm1059, %v1299, 0.0
    %v1322 = vadd.f32 %v1320, %v1321
    %v1323 = vsel %vm1059, %v1300, 0.0
    %v1324 = vadd.f32 %v1322, %v1323
    %v1325 = vsel %vm1059, %v1301, 0.0
    %v1326 = vadd.f32 %v1324, %v1325
    %v1327 = vsel %vm1059, %v1302, 0.0
    %v1328 = vadd.f32 %v1326, %v1327
    %v1329 = vsel %vm1059, %v1303, 0.0
    %v1330 = vadd.f32 %v1328, %v1329
    %v1331 = vsel %vm1059, %v1304, 0.0
    %v1332 = vadd.f32 %v1330, %v1331
    %v1333 = vsel %vm1059, %v1305, 0.0
    %v1334 = vadd.f32 %v1332, %v1333
    %v1335 = vsel %vm1059, %v1306, 0.0
    %v1336 = vadd.f32 %v1334, %v1335
    %v1337 = vsel %vm1059, %v1307, 0.0
    %v1338 = vadd.f32 %v1336, %v1337
    %1339 = vadd.xlane.f32.xlu0 %v1338
    %v1340 = vpop.xlane.xlu0 %1339
    %v1341 = vrot.slane %v1340, 4
    %v1342 = vadd.f32 %v1340, %v1341
    %v1343 = vrot.slane %v1342, 2
    %v1344 = vadd.f32 %v1342, %v1343
    %v1345 = vrot.slane %v1344, 1
    %v1346 = vadd.f32 %v1344, %v1345
    %s1347 = vtos %v1346
    %s1348 = sadd.f32 %s1099, %s1347
    %s1349 = smul.f32 %s1348, 0.5
    %v1350 = vstv %s850
    %v1351 = vrcp.pop %v1350
    %v1352 = vmul.f32 %v1350, %v1351
    %v1353 = vsub.f32 1.0, %v1352
    %v1354 = vmul.f32 %v1351, %v1353
    %v1355 = vadd.f32 %v1351, %v1354
    %vm1356 = vweird.f32 %v1350
    %vm1357 = vweird.f32 %v1351
    %vm1358 = vmor %vm1356, %vm1357
    %v1359 = vsel %vm1358, %v1351, %v1355
    %v1360 = vand.u32 2147483647, %v1350
    %vm1361 = vcmp.eq.f32.partialorder %v1360, 8.507059e+37
    %v1362 = vand.u32 %v1350, 2147483648
    %v1363 = vor.u32 1.1754944e-38, %v1362
    %v1364 = vsel %vm1361, %v1363, %v1359
    %s1365 = vtos %v1364
    %s1366 = smul.f32 %s1349, %s1365
    %v1367 = vstv %s1366
    %vm1368 = vcmask 0
    %1369 = vst.msk [vmem:[#allocation12] sm:$0x1] %vm1368, %v1367
    // Predicated region
    $region26: #{tpu_custom_call.1} parent=1 // pred_check
      _
    $region27: #{tpu_custom_call.1} parent=1 // pred_check_branch
      %1371 = sbr.rel (0) target = $region29
    $region28: #{tpu_custom_call.1} parent=1 // pred_region
      %1373 = vsyncadd [#allocation6], 0
      %s1374 = sshll.u32 [#allocation9], 4
      %s1375 = int_to_ptr.vmem [resolvable:$true] %s1374
      %s1376 = sshll.u32 %s4, 4
      %s1377 = int_to_ptr.hbm [resolvable:$true] %s1376
      %1382 = dma.vmem_to_hbm [thread:$0]  %s1375, 2048, %s1377, [#allocation6], 128, 128, 8
    $region29: #{tpu_custom_call.1} parent=1 // pred_fallthru
      _
    // Predicated region
    $region30: #{tpu_custom_call.1} parent=1 // pred_check
      _
    $region31: #{tpu_custom_call.1} parent=1 // pred_check_branch
      %1384 = sbr.rel (0) target = $region33
    $region32: #{tpu_custom_call.1} parent=1 // pred_region
      %1386 = vsyncadd [#allocation11], 0
      %s1387 = sshll.u32 [#allocation10], 4
      %s1388 = int_to_ptr.vmem [resolvable:$true] %s1387
      %s1389 = sshll.u32 %s5, 4
      %s1390 = int_to_ptr.hbm [resolvable:$true] %s1389
      %1395 = dma.vmem_to_hbm [thread:$0]  %s1388, 2048, %s1390, [#allocation11], 128, 128, 8
    $region33: #{tpu_custom_call.1} parent=1 // pred_fallthru
      _
    // Predicated region
    $region34: #{tpu_custom_call.1} parent=1 // pred_check
      _
    $region35: #{tpu_custom_call.1} parent=1 // pred_check_branch
      %1397 = sbr.rel (0) target = $region37
    $region36: #{tpu_custom_call.1} parent=1 // pred_region
      %1399 = vsyncadd [#allocation11], 0
      %s1401 = sshll.u32 [#allocation12], 4
      %s1402 = int_to_ptr.vmem [resolvable:$true] %s1401
      %s1403 = sshll.u32 %s6, 4
      %s1404 = int_to_ptr.hbm [resolvable:$true] %s1403
      %1406 = dma.vmem_to_hbm [thread:$0]  %s1402, 16, %s1404, [#allocation11]
    $region37: #{tpu_custom_call.1} parent=1 // pred_fallthru
      _
    // Predicated region
    $region38: #{tpu_custom_call.1} parent=1 // pred_check
      _
    $region39: #{tpu_custom_call.1} parent=1 // pred_check_branch
      %1408 = sbr.rel (0) target = $region41
    $region40: #{tpu_custom_call.1} parent=1 // pred_region
      %1410 = dma.done [#allocation6], 2048
    $region41: #{tpu_custom_call.1} parent=1 // pred_fallthru
      _
    // Predicated region
    $region42: #{tpu_custom_call.1} parent=1 // pred_check
      _
    $region43: #{tpu_custom_call.1} parent=1 // pred_check_branch
      %1412 = sbr.rel (0) target = $region45
    $region44: #{tpu_custom_call.1} parent=1 // pred_region
      %1414 = dma.done [#allocation11], 2048
    $region45: #{tpu_custom_call.1} parent=1 // pred_fallthru
      _
    // Predicated region
    $region46: #{tpu_custom_call.1} parent=1 // pred_check
      _
    $region47: #{tpu_custom_call.1} parent=1 // pred_check_branch
      %1416 = sbr.rel (0) target = $region49
    $region48: #{tpu_custom_call.1} parent=1 // pred_region
      %1418 = dma.done [#allocation11], 16
    $region49: #{tpu_custom_call.1} parent=1 // pred_fallthru
      _
    %1419 = vsyncpa [#allocation5], 1
    %1420 = vsyncpa [#allocation8], 1
    %1421 = vsyncpa [#allocation6], 1
    %1422 = vsyncpa [#allocation11], 1

</llo_original>
